<compile_context>
chip_gen: v6e
topology: v6e:2x2x1
jax: 0.10.0
libtpu: 0.0.40
codegen_flags: <defaults>
</compile_context>

<pallas_src>
import jax
import jax.numpy as jnp
from jax import lax
from jax.experimental import pallas as pl
from jax.experimental.pallas import tpu as pltpu


def _round_up(x, m):
    return (x + m - 1) // m * m


def _make_lstm_kernel(n_layer, seq_len, bt, hidden, n_seq, mxu_dtype):
    H = hidden
    G = 4 * H

    def kernel(*refs):
        idx = 0
        x_ref = refs[idx]; idx += 1
        layer_refs = refs[idx:idx + 3 * n_layer]; idx += 3 * n_layer
        wc_ref = refs[idx]; idx += 1
        bc_ref = refs[idx]; idx += 1
        o_ref = refs[idx]; idx += 1
        xproj_sc = refs[idx]; idx += 1
        seq_sc = refs[idx:idx + n_seq]

        # Constant lane masks for the single-tanh gate trick (hoisted once).
        # i/f/o pre-activations were pre-scaled by 0.5 in the wrapper, so
        # 0.5*tanh(gates)+0.5 == sigmoid(pre) on those lanes; g lanes keep tanh.
        col = lax.broadcasted_iota(jnp.int32, (1, G), 1)
        is_g = jnp.logical_and(col >= 2 * H, col < 3 * H)
        act_scale = jnp.where(is_g, 1.0, 0.5).astype(jnp.float32)
        act_off = jnp.where(is_g, 0.0, 0.5).astype(jnp.float32)

        t_chunk = max(1, min(seq_len, 512 // bt))       # ~512 rows per chunk
        time_unroll = True if seq_len <= 32 else 4      # avoid giant BB / spills

        h = jnp.zeros((bt, H), jnp.float32)
        c = jnp.zeros((bt, H), jnp.float32)

        for l in range(n_layer):                        # static unroll (layers)
            wx = layer_refs[3 * l][...]                 # (Din_l, 4H) mxu dtype
            wh = layer_refs[3 * l + 1][...]             # (H, 4H)    f32
            b = layer_refs[3 * l + 2][...]              # (1, 4H)    f32

            in_ref = x_ref if l == 0 else seq_sc[(l - 1) % max(n_seq, 1)]

            # Hoisted x-projection for ALL timesteps of this layer, chunked so
            # the hoisted matmul stays MXU-bound (not spill-bound) at large T*B.
            for t0 in range(0, seq_len, t_chunk):
                nr = min(t_chunk, seq_len - t0) * bt
                r0 = t0 * bt                            # static, sublane-aligned
                chunk = in_ref[pl.ds(r0, nr), :]
                if chunk.dtype != mxu_dtype:
                    chunk = chunk.astype(mxu_dtype)
                xproj_sc[pl.ds(r0, nr), :] = jnp.dot(
                    chunk, wx, preferred_element_type=jnp.float32) + b

            write_out = l < n_layer - 1
            out_sc = seq_sc[l % n_seq] if write_out else None

            # TODO(synk): keep `wh` resident in the MXU across the time loop via
            # pltpu.matmul_push_rhs / matmul_acc_lhs / matmul_pop (removes the
            # per-step weight push from the serial dependence chain).
            def step(t, carry, wh=wh, out_sc=out_sc, write_out=write_out):
                h, c = carry
                row = pl.multiple_of(t * bt, bt)        # sublane-aligned start
                gates = xproj_sc[pl.ds(row, bt), :] + jnp.dot(
                    h, wh, preferred_element_type=jnp.float32)   # (bt, 4H)
                act = jnp.tanh(gates) * act_scale + act_off      # 1 EUP pass
                i_g = act[:, 0:H]                       # sigmoid(i)
                f_g = act[:, H:2 * H]                   # sigmoid(f)
                g_g = act[:, 2 * H:3 * H]               # tanh(g)
                o_g = act[:, 3 * H:4 * H]               # sigmoid(o)
                c_new = f_g * c + i_g * g_g
                h_new = o_g * jnp.tanh(c_new)
                if write_out:                           # last layer skips this
                    out_sc[pl.ds(row, bt), :] = h_new
                return (h_new, c_new)

            h0 = jnp.zeros((bt, H), jnp.float32)
            c0 = jnp.zeros((bt, H), jnp.float32)
            h, c = lax.fori_loop(0, seq_len, step, (h0, c0), unroll=time_unroll)

        # classifier on the last timestep's hidden state of the top layer
        logits = jnp.dot(h, wc_ref[...],
                         preferred_element_type=jnp.float32) + bc_ref[...]
        o_ref[...] = logits.astype(o_ref.dtype)

    return kernel


def rnn_forward(x, layer_params, w_cls, b_cls, *, mxu_dtype=jnp.bfloat16,
                num_batch_tiles=None):
    """Forward pass of the PyTorch `Rnn` module.

    x:            (B, T, in_dim)  batch_first, f32
    layer_params: list of (w_ih (4H, Din), w_hh (4H, H), b_ih (4H,), b_hh (4H,))
                  in PyTorch nn.LSTM layout (gate order i, f, g, o)
    w_cls:        (n_class, H), b_cls: (n_class,)
    returns       (B, n_class)
    """
    B, T, in_dim = x.shape
    n_layer = len(layer_params)
    H = layer_params[0][1].shape[1]
    n_class = w_cls.shape[0]
    G = 4 * H

    # Batch-tile grid: 2 tiles once batch is big enough so the "parallel" axis
    # can be sharded across v7x's two TensorCores; 1 tile for tiny batches.
    if num_batch_tiles is None:
        num_batch_tiles = 2 if B >= 16 else 1
    B_pad = _round_up(B, 8 * num_batch_tiles)
    bt = B_pad // num_batch_tiles
    C_pad = _round_up(n_class, 128)          # lane-dense classifier output

    # (B,T,D) -> (ntiles, T*bt, D): per tile, time-major with batch minor.
    x_p = jnp.pad(x.astype(jnp.float32), ((0, B_pad - B), (0, 0), (0, 0)))
    x_p = x_p.reshape(num_batch_tiles, bt, T, in_dim).transpose(0, 2, 1, 3)
    x_flat = x_p.reshape(num_batch_tiles, T * bt, in_dim).astype(mxu_dtype)

    # Pre-scale i/f/o gate columns by 0.5 (single-tanh gate trick; see kernel).
    gate_scale = jnp.concatenate([
        jnp.full((2 * H,), 0.5, jnp.float32),
        jnp.ones((H,), jnp.float32),
        jnp.full((H,), 0.5, jnp.float32),
    ])

    kernel_inputs = [x_flat]
    for (w_ih, w_hh, b_ih, b_hh) in layer_params:
        wx = jnp.transpose(w_ih).astype(jnp.float32) * gate_scale[None, :]
        wh = jnp.transpose(w_hh).astype(jnp.float32) * gate_scale[None, :]
        bb = ((b_ih + b_hh).astype(jnp.float32) * gate_scale)[None, :]
        kernel_inputs.append(wx.astype(mxu_dtype))   # (Din, 4H) MXU operand
        kernel_inputs.append(wh)                     # (H, 4H) f32 (recurrence)
        kernel_inputs.append(bb)                     # (1, 4H) f32

    wc = jnp.zeros((H, C_pad), jnp.float32).at[:, :n_class].set(
        jnp.transpose(w_cls).astype(jnp.float32))
    bc = jnp.zeros((1, C_pad), jnp.float32).at[0, :n_class].set(
        b_cls.astype(jnp.float32))
    kernel_inputs += [wc, bc]

    def _full(a):
        return pl.BlockSpec(a.shape, lambda i: (0,) * a.ndim)

    in_specs = [pl.BlockSpec((None, T * bt, in_dim), lambda i: (i, 0, 0))]
    in_specs += [_full(a) for a in kernel_inputs[1:]]

    n_seq = min(n_layer - 1, 2)              # only allocate what is written
    scratch_shapes = [pltpu.VMEM((T * bt, G), jnp.float32)]      # x-projections
    scratch_shapes += [pltpu.VMEM((T * bt, H), jnp.float32)] * n_seq

    # VMEM budget from the actual resident footprint (+50% margin).
    x_item = jnp.dtype(mxu_dtype).itemsize
    vmem_bytes = (
        2 * T * bt * in_dim * x_item                                  # x block
        + sum(int(a.size) * a.dtype.itemsize for a in kernel_inputs[1:])
        + (T * bt * G + n_seq * T * bt * H) * 4                       # scratch
        + 2 * bt * C_pad * 4)                                         # out block
    vmem_limit = min(max(int(vmem_bytes * 1.5) + (8 << 20), 32 << 20), 100 << 20)

    kernel = _make_lstm_kernel(n_layer, T, bt, H, n_seq, mxu_dtype)

    out = pl.pallas_call(
        kernel,
        grid=(num_batch_tiles,),
        out_shape=jax.ShapeDtypeStruct((B_pad, C_pad), jnp.float32),
        in_specs=in_specs,
        out_specs=pl.BlockSpec((bt, C_pad), lambda i: (i, 0)),
        scratch_shapes=scratch_shapes,
        compiler_params=pltpu.CompilerParams(
            dimension_semantics=("parallel",),
            vmem_limit_bytes=vmem_limit),
    )(*kernel_inputs)

    return out[:B, :n_class]


# ---------------- pure-JAX reference (for correctness check) ----------------
def _ref_forward(x, layer_params, w_cls, b_cls):
    B, T, _ = x.shape
    H = layer_params[0][1].shape[1]
    seq = x
    for (w_ih, w_hh, b_ih, b_hh) in layer_params:
        h = jnp.zeros((B, H), jnp.float32)
        c = jnp.zeros((B, H), jnp.float32)
        outs = []
        for t in range(T):
            gates = seq[:, t, :] @ w_ih.T + b_ih + h @ w_hh.T + b_hh
            i, f, g, o = jnp.split(gates, 4, axis=-1)
            i = jax.nn.sigmoid(i)
            f = jax.nn.sigmoid(f)
            g = jnp.tanh(g)
            o = jax.nn.sigmoid(o)
            c = f * c + i * g
            h = o * jnp.tanh(c)
            outs.append(h)
        seq = jnp.stack(outs, axis=1)
    last = seq[:, -1, :]
    return last @ w_cls.T + b_cls


if __name__ == "__main__":
    B, T, in_dim, hidden, n_layer, n_class = 2, 8, 16, 32, 2, 10

    key = jax.random.PRNGKey(0)
    keys = jax.random.split(key, 3 + 4 * n_layer)

    x = jax.random.normal(keys[0], (B, T, in_dim), jnp.float32)
    layer_params = []
    kidx = 1
    for l in range(n_layer):
        din = in_dim if l == 0 else hidden
        w_ih = jax.random.normal(keys[kidx], (4 * hidden, din), jnp.float32) * 0.2
        kidx += 1
        w_hh = jax.random.normal(keys[kidx], (4 * hidden, hidden), jnp.float32) * 0.2
        kidx += 1
        b_ih = jax.random.normal(keys[kidx], (4 * hidden,), jnp.float32) * 0.1
        kidx += 1
        b_hh = jax.random.normal(keys[kidx], (4 * hidden,), jnp.float32) * 0.1
        kidx += 1
        layer_params.append((w_ih, w_hh, b_ih, b_hh))
    w_cls = jax.random.normal(keys[kidx], (n_class, hidden), jnp.float32) * 0.2
    kidx += 1
    b_cls = jax.random.normal(keys[kidx], (n_class,), jnp.float32) * 0.1

    ref = _ref_forward(x, layer_params, w_cls, b_cls)

    # f32 MXU operands: tight tolerance.
    out_f32 = jax.block_until_ready(
        rnn_forward(x, layer_params, w_cls, b_cls, mxu_dtype=jnp.float32))
    assert out_f32.shape == (B, n_class)
    err = jnp.max(jnp.abs(out_f32 - ref))
    assert jnp.allclose(out_f32, ref, atol=2e-3, rtol=2e-3), f"f32 max err {err}"

    # bf16 MXU operands for the hoisted x-projection (v6e/v7x throughput path).
    out_bf = jax.block_until_ready(
        rnn_forward(x, layer_params, w_cls, b_cls, mxu_dtype=jnp.bfloat16))
    err_bf = jnp.max(jnp.abs(out_bf - ref))
    assert jnp.allclose(out_bf, ref, atol=3e-2, rtol=3e-2), f"bf16 max err {err_bf}"

    # Exercise the 2-tile "parallel" batch grid (v7x megacore path).
    B2 = 16
    x2 = jax.random.normal(jax.random.PRNGKey(1), (B2, T, in_dim), jnp.float32)
    out2 = jax.block_until_ready(
        rnn_forward(x2, layer_params, w_cls, b_cls, mxu_dtype=jnp.float32))
    ref2 = _ref_forward(x2, layer_params, w_cls, b_cls)
    err2 = jnp.max(jnp.abs(out2 - ref2))
    assert jnp.allclose(out2, ref2, atol=2e-3, rtol=2e-3), f"grid max err {err2}"

    print("KERNEL_OK")
</pallas_src>

<mosaic_0001>
module attributes {stable_mosaic.version = 11 : i64} {
  func.func @kernel(%arg0: i32, %arg1: memref<1x64x16xf32, #tpu.memory_space<vmem>>, %arg2: memref<16x128xf32, #tpu.memory_space<vmem>>, %arg3: memref<32x128xf32, #tpu.memory_space<vmem>>, %arg4: memref<1x128xf32, #tpu.memory_space<vmem>>, %arg5: memref<32x128xf32, #tpu.memory_space<vmem>>, %arg6: memref<32x128xf32, #tpu.memory_space<vmem>>, %arg7: memref<1x128xf32, #tpu.memory_space<vmem>>, %arg8: memref<32x128xf32, #tpu.memory_space<vmem>>, %arg9: memref<1x128xf32, #tpu.memory_space<vmem>>, %arg10: memref<8x128xf32, #tpu.memory_space<vmem>>, %arg11: memref<64x128xf32, #tpu.memory_space<vmem>>, %arg12: memref<64x32xf32, #tpu.memory_space<vmem>>) attributes {dimension_semantics = [#tpu.dimension_semantics<parallel>], iteration_bounds = array<i64: 1>, scalar_prefetch = 0 : i64, scratch_operands = 2 : i64, tpu.core_type = #tpu.core_type<tc>, window_params = [{transform_indices = @transform_0, window_bounds = array<i64: 1, 64, 16>}, {pipeline_mode = #tpu.pipeline_mode<synchronous>, transform_indices = @transform_1, window_bounds = array<i64: 16, 128>}, {pipeline_mode = #tpu.pipeline_mode<synchronous>, transform_indices = @transform_2, window_bounds = array<i64: 32, 128>}, {pipeline_mode = #tpu.pipeline_mode<synchronous>, transform_indices = @transform_3, window_bounds = array<i64: 1, 128>}, {pipeline_mode = #tpu.pipeline_mode<synchronous>, transform_indices = @transform_4, window_bounds = array<i64: 32, 128>}, {pipeline_mode = #tpu.pipeline_mode<synchronous>, transform_indices = @transform_5, window_bounds = array<i64: 32, 128>}, {pipeline_mode = #tpu.pipeline_mode<synchronous>, transform_indices = @transform_6, window_bounds = array<i64: 1, 128>}, {pipeline_mode = #tpu.pipeline_mode<synchronous>, transform_indices = @transform_7, window_bounds = array<i64: 32, 128>}, {pipeline_mode = #tpu.pipeline_mode<synchronous>, transform_indices = @transform_8, window_bounds = array<i64: 1, 128>}, {transform_indices = @transform_9, window_bounds = array<i64: 8, 128>}]} {
    %0 = tpu.iota {dimensions = array<i32: 1>} : vector<1x128xi32>
    %c64_i32 = arith.constant 64 : i32
    %1 = vector.broadcast %c64_i32 : i32 to vector<1x128xi32>
    %2 = arith.cmpi sge, %0, %1 : vector<1x128xi32>
    %c96_i32 = arith.constant 96 : i32
    %3 = vector.broadcast %c96_i32 : i32 to vector<1x128xi32>
    %4 = arith.cmpi slt, %0, %3 : vector<1x128xi32>
    %5 = arith.andi %2, %4 : vector<1x128xi1>
    %cst = arith.constant 1.000000e+00 : f32
    %cst_0 = arith.constant 5.000000e-01 : f32
    %6 = vector.broadcast %cst : f32 to vector<1x128xf32>
    %7 = vector.broadcast %cst_0 : f32 to vector<1x128xf32>
    %8 = arith.select %5, %6, %7 : vector<1x128xi1>, vector<1x128xf32>
    %cst_1 = arith.constant 0.000000e+00 : f32
    %cst_2 = arith.constant 5.000000e-01 : f32
    %9 = vector.broadcast %cst_1 : f32 to vector<1x128xf32>
    %10 = vector.broadcast %cst_2 : f32 to vector<1x128xf32>
    %11 = arith.select %5, %9, %10 : vector<1x128xi1>, vector<1x128xf32>
    %c0 = arith.constant 0 : index
    %c0_3 = arith.constant 0 : index
    %12 = vector.load %arg2[%c0, %c0_3] : memref<16x128xf32, #tpu.memory_space<vmem>>, vector<16x128xf32>
    %c0_4 = arith.constant 0 : index
    %c0_5 = arith.constant 0 : index
    %13 = vector.load %arg3[%c0_4, %c0_5] : memref<32x128xf32, #tpu.memory_space<vmem>>, vector<32x128xf32>
    %c0_6 = arith.constant 0 : index
    %c0_7 = arith.constant 0 : index
    %14 = vector.load %arg4[%c0_6, %c0_7] : memref<1x128xf32, #tpu.memory_space<vmem>>, vector<1x128xf32>
    %c0_8 = arith.constant 0 : index
    %c0_9 = arith.constant 0 : index
    %c0_10 = arith.constant 0 : index
    %15 = vector.load %arg1[%c0_8, %c0_9, %c0_10] : memref<1x64x16xf32, #tpu.memory_space<vmem>>, vector<1x64x16xf32>
    %16 = vector.shape_cast %15 : vector<1x64x16xf32> to vector<64x16xf32>
    %cst_11 = arith.constant dense<0.000000e+00> : vector<64x128xf32>
    %17 = tpu.matmul %16, %12, %cst_11 {dimension_numbers = #tpu.dot_dimension_numbers<[1], [0], [0], [1], [0, 0, 1, 1], [], []>} : vector<64x16xf32>, vector<16x128xf32>, vector<64x128xf32> -> vector<64x128xf32>
    %18 = vector.broadcast %14 : vector<1x128xf32> to vector<64x128xf32>
    %19 = arith.addf %17, %18 : vector<64x128xf32>
    %c0_12 = arith.constant 0 : index
    %c0_13 = arith.constant 0 : index
    %20 = vector.load %arg11[%c0_12, %c0_13] : memref<64x128xf32, #tpu.memory_space<vmem>>, vector<64x128xf32>
    tpu.vector_store %arg11[%c0_12, %c0_13], %19 {strides = array<i32>} : memref<64x128xf32, #tpu.memory_space<vmem>>, vector<64x128xf32>,
    %cst_14 = arith.constant 0.000000e+00 : f32
    %21 = vector.broadcast %cst_14 : f32 to vector<8x32xf32>
    %cst_15 = arith.constant 0.000000e+00 : f32
    %22 = vector.broadcast %cst_15 : f32 to vector<8x32xf32>
    %c0_i32 = arith.constant 0 : i32
    %c8_i32 = arith.constant 8 : i32
    %23 = arith.muli %c0_i32, %c8_i32 : i32
    %24 = tpu.assume_multiple %23, 8 : i32
    %25 = arith.index_cast %24 : i32 to index
    %c0_16 = arith.constant 0 : index
    %26 = vector.load %arg11[%25, %c0_16] : memref<64x128xf32, #tpu.memory_space<vmem>>, vector<8x128xf32>
    %cst_17 = arith.constant dense<0.000000e+00> : vector<8x128xf32>
    %27 = tpu.matmul %21, %13, %cst_17 {dimension_numbers = #tpu.dot_dimension_numbers<[1], [0], [0], [1], [0, 0, 1, 1], [], []>} : vector<8x32xf32>, vector<32x128xf32>, vector<8x128xf32> -> vector<8x128xf32>
    %28 = arith.addf %26, %27 : vector<8x128xf32>
    %29 = math.tanh %28 : vector<8x128xf32>
    %30 = vector.broadcast %8 : vector<1x128xf32> to vector<8x128xf32>
    %31 = arith.mulf %29, %30 : vector<8x128xf32>
    %32 = vector.broadcast %11 : vector<1x128xf32> to vector<8x128xf32>
    %33 = arith.addf %31, %32 : vector<8x128xf32>
    %34 = vector.extract_strided_slice %33 {offsets = [0, 0], sizes = [8, 32], strides = [1, 1]} : vector<8x128xf32> to vector<8x32xf32>
    %35 = vector.extract_strided_slice %33 {offsets = [0, 32], sizes = [8, 32], strides = [1, 1]} : vector<8x128xf32> to vector<8x32xf32>
    %36 = vector.extract_strided_slice %33 {offsets = [0, 64], sizes = [8, 32], strides = [1, 1]} : vector<8x128xf32> to vector<8x32xf32>
    %37 = vector.extract_strided_slice %33 {offsets = [0, 96], sizes = [8, 32], strides = [1, 1]} : vector<8x128xf32> to vector<8x32xf32>
    %38 = arith.mulf %35, %22 : vector<8x32xf32>
    %39 = arith.mulf %34, %36 : vector<8x32xf32>
    %40 = arith.addf %38, %39 : vector<8x32xf32>
    %41 = math.tanh %40 : vector<8x32xf32>
    %42 = arith.mulf %37, %41 : vector<8x32xf32>
    %43 = arith.index_cast %24 : i32 to index
    %c0_18 = arith.constant 0 : index
    %44 = vector.load %arg12[%43, %c0_18] : memref<64x32xf32, #tpu.memory_space<vmem>>, vector<8x32xf32>
    tpu.vector_store %arg12[%43, %c0_18], %42 {strides = array<i32>} : memref<64x32xf32, #tpu.memory_space<vmem>>, vector<8x32xf32>,
    %c1_i32 = arith.constant 1 : i32
    %c8_i32_19 = arith.constant 8 : i32
    %45 = arith.muli %c1_i32, %c8_i32_19 : i32
    %46 = tpu.assume_multiple %45, 8 : i32
    %47 = arith.index_cast %46 : i32 to index
    %c0_20 = arith.constant 0 : index
    %48 = vector.load %arg11[%47, %c0_20] : memref<64x128xf32, #tpu.memory_space<vmem>>, vector<8x128xf32>
    %cst_21 = arith.constant dense<0.000000e+00> : vector<8x128xf32>
    %49 = tpu.matmul %42, %13, %cst_21 {dimension_numbers = #tpu.dot_dimension_numbers<[1], [0], [0], [1], [0, 0, 1, 1], [], []>} : vector<8x32xf32>, vector<32x128xf32>, vector<8x128xf32> -> vector<8x128xf32>
    %50 = arith.addf %48, %49 : vector<8x128xf32>
    %51 = math.tanh %50 : vector<8x128xf32>
    %52 = vector.broadcast %8 : vector<1x128xf32> to vector<8x128xf32>
    %53 = arith.mulf %51, %52 : vector<8x128xf32>
    %54 = vector.broadcast %11 : vector<1x128xf32> to vector<8x128xf32>
    %55 = arith.addf %53, %54 : vector<8x128xf32>
    %56 = vector.extract_strided_slice %55 {offsets = [0, 0], sizes = [8, 32], strides = [1, 1]} : vector<8x128xf32> to vector<8x32xf32>
    %57 = vector.extract_strided_slice %55 {offsets = [0, 32], sizes = [8, 32], strides = [1, 1]} : vector<8x128xf32> to vector<8x32xf32>
    %58 = vector.extract_strided_slice %55 {offsets = [0, 64], sizes = [8, 32], strides = [1, 1]} : vector<8x128xf32> to vector<8x32xf32>
    %59 = vector.extract_strided_slice %55 {offsets = [0, 96], sizes = [8, 32], strides = [1, 1]} : vector<8x128xf32> to vector<8x32xf32>
    %60 = arith.mulf %57, %40 : vector<8x32xf32>
    %61 = arith.mulf %56, %58 : vector<8x32xf32>
    %62 = arith.addf %60, %61 : vector<8x32xf32>
    %63 = math.tanh %62 : vector<8x32xf32>
    %64 = arith.mulf %59, %63 : vector<8x32xf32>
    %65 = arith.index_cast %46 : i32 to index
    %c0_22 = arith.constant 0 : index
    %66 = vector.load %arg12[%65, %c0_22] : memref<64x32xf32, #tpu.memory_space<vmem>>, vector<8x32xf32>
    tpu.vector_store %arg12[%65, %c0_22], %64 {strides = array<i32>} : memref<64x32xf32, #tpu.memory_space<vmem>>, vector<8x32xf32>,
    %c2_i32 = arith.constant 2 : i32
    %c8_i32_23 = arith.constant 8 : i32
    %67 = arith.muli %c2_i32, %c8_i32_23 : i32
    %68 = tpu.assume_multiple %67, 8 : i32
    %69 = arith.index_cast %68 : i32 to index
    %c0_24 = arith.constant 0 : index
    %70 = vector.load %arg11[%69, %c0_24] : memref<64x128xf32, #tpu.memory_space<vmem>>, vector<8x128xf32>
    %cst_25 = arith.constant dense<0.000000e+00> : vector<8x128xf32>
    %71 = tpu.matmul %64, %13, %cst_25 {dimension_numbers = #tpu.dot_dimension_numbers<[1], [0], [0], [1], [0, 0, 1, 1], [], []>} : vector<8x32xf32>, vector<32x128xf32>, vector<8x128xf32> -> vector<8x128xf32>
    %72 = arith.addf %70, %71 : vector<8x128xf32>
    %73 = math.tanh %72 : vector<8x128xf32>
    %74 = vector.broadcast %8 : vector<1x128xf32> to vector<8x128xf32>
    %75 = arith.mulf %73, %74 : vector<8x128xf32>
    %76 = vector.broadcast %11 : vector<1x128xf32> to vector<8x128xf32>
    %77 = arith.addf %75, %76 : vector<8x128xf32>
    %78 = vector.extract_strided_slice %77 {offsets = [0, 0], sizes = [8, 32], strides = [1, 1]} : vector<8x128xf32> to vector<8x32xf32>
    %79 = vector.extract_strided_slice %77 {offsets = [0, 32], sizes = [8, 32], strides = [1, 1]} : vector<8x128xf32> to vector<8x32xf32>
    %80 = vector.extract_strided_slice %77 {offsets = [0, 64], sizes = [8, 32], strides = [1, 1]} : vector<8x128xf32> to vector<8x32xf32>
    %81 = vector.extract_strided_slice %77 {offsets = [0, 96], sizes = [8, 32], strides = [1, 1]} : vector<8x128xf32> to vector<8x32xf32>
    %82 = arith.mulf %79, %62 : vector<8x32xf32>
    %83 = arith.mulf %78, %80 : vector<8x32xf32>
    %84 = arith.addf %82, %83 : vector<8x32xf32>
    %85 = math.tanh %84 : vector<8x32xf32>
    %86 = arith.mulf %81, %85 : vector<8x32xf32>
    %87 = arith.index_cast %68 : i32 to index
    %c0_26 = arith.constant 0 : index
    %88 = vector.load %arg12[%87, %c0_26] : memref<64x32xf32, #tpu.memory_space<vmem>>, vector<8x32xf32>
    tpu.vector_store %arg12[%87, %c0_26], %86 {strides = array<i32>} : memref<64x32xf32, #tpu.memory_space<vmem>>, vector<8x32xf32>,
    %c3_i32 = arith.constant 3 : i32
    %c8_i32_27 = arith.constant 8 : i32
    %89 = arith.muli %c3_i32, %c8_i32_27 : i32
    %90 = tpu.assume_multiple %89, 8 : i32
    %91 = arith.index_cast %90 : i32 to index
    %c0_28 = arith.constant 0 : index
    %92 = vector.load %arg11[%91, %c0_28] : memref<64x128xf32, #tpu.memory_space<vmem>>, vector<8x128xf32>
    %cst_29 = arith.constant dense<0.000000e+00> : vector<8x128xf32>
    %93 = tpu.matmul %86, %13, %cst_29 {dimension_numbers = #tpu.dot_dimension_numbers<[1], [0], [0], [1], [0, 0, 1, 1], [], []>} : vector<8x32xf32>, vector<32x128xf32>, vector<8x128xf32> -> vector<8x128xf32>
    %94 = arith.addf %92, %93 : vector<8x128xf32>
    %95 = math.tanh %94 : vector<8x128xf32>
    %96 = vector.broadcast %8 : vector<1x128xf32> to vector<8x128xf32>
    %97 = arith.mulf %95, %96 : vector<8x128xf32>
    %98 = vector.broadcast %11 : vector<1x128xf32> to vector<8x128xf32>
    %99 = arith.addf %97, %98 : vector<8x128xf32>
    %100 = vector.extract_strided_slice %99 {offsets = [0, 0], sizes = [8, 32], strides = [1, 1]} : vector<8x128xf32> to vector<8x32xf32>
    %101 = vector.extract_strided_slice %99 {offsets = [0, 32], sizes = [8, 32], strides = [1, 1]} : vector<8x128xf32> to vector<8x32xf32>
    %102 = vector.extract_strided_slice %99 {offsets = [0, 64], sizes = [8, 32], strides = [1, 1]} : vector<8x128xf32> to vector<8x32xf32>
    %103 = vector.extract_strided_slice %99 {offsets = [0, 96], sizes = [8, 32], strides = [1, 1]} : vector<8x128xf32> to vector<8x32xf32>
    %104 = arith.mulf %101, %84 : vector<8x32xf32>
    %105 = arith.mulf %100, %102 : vector<8x32xf32>
    %106 = arith.addf %104, %105 : vector<8x32xf32>
    %107 = math.tanh %106 : vector<8x32xf32>
    %108 = arith.mulf %103, %107 : vector<8x32xf32>
    %109 = arith.index_cast %90 : i32 to index
    %c0_30 = arith.constant 0 : index
    %110 = vector.load %arg12[%109, %c0_30] : memref<64x32xf32, #tpu.memory_space<vmem>>, vector<8x32xf32>
    tpu.vector_store %arg12[%109, %c0_30], %108 {strides = array<i32>} : memref<64x32xf32, #tpu.memory_space<vmem>>, vector<8x32xf32>,
    %c4_i32 = arith.constant 4 : i32
    %c8_i32_31 = arith.constant 8 : i32
    %111 = arith.muli %c4_i32, %c8_i32_31 : i32
    %112 = tpu.assume_multiple %111, 8 : i32
    %113 = arith.index_cast %112 : i32 to index
    %c0_32 = arith.constant 0 : index
    %114 = vector.load %arg11[%113, %c0_32] : memref<64x128xf32, #tpu.memory_space<vmem>>, vector<8x128xf32>
    %cst_33 = arith.constant dense<0.000000e+00> : vector<8x128xf32>
    %115 = tpu.matmul %108, %13, %cst_33 {dimension_numbers = #tpu.dot_dimension_numbers<[1], [0], [0], [1], [0, 0, 1, 1], [], []>} : vector<8x32xf32>, vector<32x128xf32>, vector<8x128xf32> -> vector<8x128xf32>
    %116 = arith.addf %114, %115 : vector<8x128xf32>
    %117 = math.tanh %116 : vector<8x128xf32>
    %118 = vector.broadcast %8 : vector<1x128xf32> to vector<8x128xf32>
    %119 = arith.mulf %117, %118 : vector<8x128xf32>
    %120 = vector.broadcast %11 : vector<1x128xf32> to vector<8x128xf32>
    %121 = arith.addf %119, %120 : vector<8x128xf32>
    %122 = vector.extract_strided_slice %121 {offsets = [0, 0], sizes = [8, 32], strides = [1, 1]} : vector<8x128xf32> to vector<8x32xf32>
    %123 = vector.extract_strided_slice %121 {offsets = [0, 32], sizes = [8, 32], strides = [1, 1]} : vector<8x128xf32> to vector<8x32xf32>
    %124 = vector.extract_strided_slice %121 {offsets = [0, 64], sizes = [8, 32], strides = [1, 1]} : vector<8x128xf32> to vector<8x32xf32>
    %125 = vector.extract_strided_slice %121 {offsets = [0, 96], sizes = [8, 32], strides = [1, 1]} : vector<8x128xf32> to vector<8x32xf32>
    %126 = arith.mulf %123, %106 : vector<8x32xf32>
    %127 = arith.mulf %122, %124 : vector<8x32xf32>
    %128 = arith.addf %126, %127 : vector<8x32xf32>
    %129 = math.tanh %128 : vector<8x32xf32>
    %130 = arith.mulf %125, %129 : vector<8x32xf32>
    %131 = arith.index_cast %112 : i32 to index
    %c0_34 = arith.constant 0 : index
    %132 = vector.load %arg12[%131, %c0_34] : memref<64x32xf32, #tpu.memory_space<vmem>>, vector<8x32xf32>
    tpu.vector_store %arg12[%131, %c0_34], %130 {strides = array<i32>} : memref<64x32xf32, #tpu.memory_space<vmem>>, vector<8x32xf32>,
    %c5_i32 = arith.constant 5 : i32
    %c8_i32_35 = arith.constant 8 : i32
    %133 = arith.muli %c5_i32, %c8_i32_35 : i32
    %134 = tpu.assume_multiple %133, 8 : i32
    %135 = arith.index_cast %134 : i32 to index
    %c0_36 = arith.constant 0 : index
    %136 = vector.load %arg11[%135, %c0_36] : memref<64x128xf32, #tpu.memory_space<vmem>>, vector<8x128xf32>
    %cst_37 = arith.constant dense<0.000000e+00> : vector<8x128xf32>
    %137 = tpu.matmul %130, %13, %cst_37 {dimension_numbers = #tpu.dot_dimension_numbers<[1], [0], [0], [1], [0, 0, 1, 1], [], []>} : vector<8x32xf32>, vector<32x128xf32>, vector<8x128xf32> -> vector<8x128xf32>
    %138 = arith.addf %136, %137 : vector<8x128xf32>
    %139 = math.tanh %138 : vector<8x128xf32>
    %140 = vector.broadcast %8 : vector<1x128xf32> to vector<8x128xf32>
    %141 = arith.mulf %139, %140 : vector<8x128xf32>
    %142 = vector.broadcast %11 : vector<1x128xf32> to vector<8x128xf32>
    %143 = arith.addf %141, %142 : vector<8x128xf32>
    %144 = vector.extract_strided_slice %143 {offsets = [0, 0], sizes = [8, 32], strides = [1, 1]} : vector<8x128xf32> to vector<8x32xf32>
    %145 = vector.extract_strided_slice %143 {offsets = [0, 32], sizes = [8, 32], strides = [1, 1]} : vector<8x128xf32> to vector<8x32xf32>
    %146 = vector.extract_strided_slice %143 {offsets = [0, 64], sizes = [8, 32], strides = [1, 1]} : vector<8x128xf32> to vector<8x32xf32>
    %147 = vector.extract_strided_slice %143 {offsets = [0, 96], sizes = [8, 32], strides = [1, 1]} : vector<8x128xf32> to vector<8x32xf32>
    %148 = arith.mulf %145, %128 : vector<8x32xf32>
    %149 = arith.mulf %144, %146 : vector<8x32xf32>
    %150 = arith.addf %148, %149 : vector<8x32xf32>
    %151 = math.tanh %150 : vector<8x32xf32>
    %152 = arith.mulf %147, %151 : vector<8x32xf32>
    %153 = arith.index_cast %134 : i32 to index
    %c0_38 = arith.constant 0 : index
    %154 = vector.load %arg12[%153, %c0_38] : memref<64x32xf32, #tpu.memory_space<vmem>>, vector<8x32xf32>
    tpu.vector_store %arg12[%153, %c0_38], %152 {strides = array<i32>} : memref<64x32xf32, #tpu.memory_space<vmem>>, vector<8x32xf32>,
    %c6_i32 = arith.constant 6 : i32
    %c8_i32_39 = arith.constant 8 : i32
    %155 = arith.muli %c6_i32, %c8_i32_39 : i32
    %156 = tpu.assume_multiple %155, 8 : i32
    %157 = arith.index_cast %156 : i32 to index
    %c0_40 = arith.constant 0 : index
    %158 = vector.load %arg11[%157, %c0_40] : memref<64x128xf32, #tpu.memory_space<vmem>>, vector<8x128xf32>
    %cst_41 = arith.constant dense<0.000000e+00> : vector<8x128xf32>
    %159 = tpu.matmul %152, %13, %cst_41 {dimension_numbers = #tpu.dot_dimension_numbers<[1], [0], [0], [1], [0, 0, 1, 1], [], []>} : vector<8x32xf32>, vector<32x128xf32>, vector<8x128xf32> -> vector<8x128xf32>
    %160 = arith.addf %158, %159 : vector<8x128xf32>
    %161 = math.tanh %160 : vector<8x128xf32>
    %162 = vector.broadcast %8 : vector<1x128xf32> to vector<8x128xf32>
    %163 = arith.mulf %161, %162 : vector<8x128xf32>
    %164 = vector.broadcast %11 : vector<1x128xf32> to vector<8x128xf32>
    %165 = arith.addf %163, %164 : vector<8x128xf32>
    %166 = vector.extract_strided_slice %165 {offsets = [0, 0], sizes = [8, 32], strides = [1, 1]} : vector<8x128xf32> to vector<8x32xf32>
    %167 = vector.extract_strided_slice %165 {offsets = [0, 32], sizes = [8, 32], strides = [1, 1]} : vector<8x128xf32> to vector<8x32xf32>
    %168 = vector.extract_strided_slice %165 {offsets = [0, 64], sizes = [8, 32], strides = [1, 1]} : vector<8x128xf32> to vector<8x32xf32>
    %169 = vector.extract_strided_slice %165 {offsets = [0, 96], sizes = [8, 32], strides = [1, 1]} : vector<8x128xf32> to vector<8x32xf32>
    %170 = arith.mulf %167, %150 : vector<8x32xf32>
    %171 = arith.mulf %166, %168 : vector<8x32xf32>
    %172 = arith.addf %170, %171 : vector<8x32xf32>
    %173 = math.tanh %172 : vector<8x32xf32>
    %174 = arith.mulf %169, %173 : vector<8x32xf32>
    %175 = arith.index_cast %156 : i32 to index
    %c0_42 = arith.constant 0 : index
    %176 = vector.load %arg12[%175, %c0_42] : memref<64x32xf32, #tpu.memory_space<vmem>>, vector<8x32xf32>
    tpu.vector_store %arg12[%175, %c0_42], %174 {strides = array<i32>} : memref<64x32xf32, #tpu.memory_space<vmem>>, vector<8x32xf32>,
    %c7_i32 = arith.constant 7 : i32
    %c8_i32_43 = arith.constant 8 : i32
    %177 = arith.muli %c7_i32, %c8_i32_43 : i32
    %178 = tpu.assume_multiple %177, 8 : i32
    %179 = arith.index_cast %178 : i32 to index
    %c0_44 = arith.constant 0 : index
    %180 = vector.load %arg11[%179, %c0_44] : memref<64x128xf32, #tpu.memory_space<vmem>>, vector<8x128xf32>
    %cst_45 = arith.constant dense<0.000000e+00> : vector<8x128xf32>
    %181 = tpu.matmul %174, %13, %cst_45 {dimension_numbers = #tpu.dot_dimension_numbers<[1], [0], [0], [1], [0, 0, 1, 1], [], []>} : vector<8x32xf32>, vector<32x128xf32>, vector<8x128xf32> -> vector<8x128xf32>
    %182 = arith.addf %180, %181 : vector<8x128xf32>
    %183 = math.tanh %182 : vector<8x128xf32>
    %184 = vector.broadcast %8 : vector<1x128xf32> to vector<8x128xf32>
    %185 = arith.mulf %183, %184 : vector<8x128xf32>
    %186 = vector.broadcast %11 : vector<1x128xf32> to vector<8x128xf32>
    %187 = arith.addf %185, %186 : vector<8x128xf32>
    %188 = vector.extract_strided_slice %187 {offsets = [0, 0], sizes = [8, 32], strides = [1, 1]} : vector<8x128xf32> to vector<8x32xf32>
    %189 = vector.extract_strided_slice %187 {offsets = [0, 32], sizes = [8, 32], strides = [1, 1]} : vector<8x128xf32> to vector<8x32xf32>
    %190 = vector.extract_strided_slice %187 {offsets = [0, 64], sizes = [8, 32], strides = [1, 1]} : vector<8x128xf32> to vector<8x32xf32>
    %191 = vector.extract_strided_slice %187 {offsets = [0, 96], sizes = [8, 32], strides = [1, 1]} : vector<8x128xf32> to vector<8x32xf32>
    %192 = arith.mulf %189, %172 : vector<8x32xf32>
    %193 = arith.mulf %188, %190 : vector<8x32xf32>
    %194 = arith.addf %192, %193 : vector<8x32xf32>
    %195 = math.tanh %194 : vector<8x32xf32>
    %196 = arith.mulf %191, %195 : vector<8x32xf32>
    %197 = arith.index_cast %178 : i32 to index
    %c0_46 = arith.constant 0 : index
    %198 = vector.load %arg12[%197, %c0_46] : memref<64x32xf32, #tpu.memory_space<vmem>>, vector<8x32xf32>
    tpu.vector_store %arg12[%197, %c0_46], %196 {strides = array<i32>} : memref<64x32xf32, #tpu.memory_space<vmem>>, vector<8x32xf32>,
    %c8_i32_47 = arith.constant 8 : i32
    %c0_48 = arith.constant 0 : index
    %c0_49 = arith.constant 0 : index
    %199 = vector.load %arg5[%c0_48, %c0_49] : memref<32x128xf32, #tpu.memory_space<vmem>>, vector<32x128xf32>
    %c0_50 = arith.constant 0 : index
    %c0_51 = arith.constant 0 : index
    %200 = vector.load %arg6[%c0_50, %c0_51] : memref<32x128xf32, #tpu.memory_space<vmem>>, vector<32x128xf32>
    %c0_52 = arith.constant 0 : index
    %c0_53 = arith.constant 0 : index
    %201 = vector.load %arg7[%c0_52, %c0_53] : memref<1x128xf32, #tpu.memory_space<vmem>>, vector<1x128xf32>
    %c0_54 = arith.constant 0 : index
    %c0_55 = arith.constant 0 : index
    %202 = vector.load %arg12[%c0_54, %c0_55] : memref<64x32xf32, #tpu.memory_space<vmem>>, vector<64x32xf32>
    %cst_56 = arith.constant dense<0.000000e+00> : vector<64x128xf32>
    %203 = tpu.matmul %202, %199, %cst_56 {dimension_numbers = #tpu.dot_dimension_numbers<[1], [0], [0], [1], [0, 0, 1, 1], [], []>} : vector<64x32xf32>, vector<32x128xf32>, vector<64x128xf32> -> vector<64x128xf32>
    %204 = vector.broadcast %201 : vector<1x128xf32> to vector<64x128xf32>
    %205 = arith.addf %203, %204 : vector<64x128xf32>
    %c0_57 = arith.constant 0 : index
    %c0_58 = arith.constant 0 : index
    %206 = vector.load %arg11[%c0_57, %c0_58] : memref<64x128xf32, #tpu.memory_space<vmem>>, vector<64x128xf32>
    tpu.vector_store %arg11[%c0_57, %c0_58], %205 {strides = array<i32>} : memref<64x128xf32, #tpu.memory_space<vmem>>, vector<64x128xf32>,
    %cst_59 = arith.constant 0.000000e+00 : f32
    %207 = vector.broadcast %cst_59 : f32 to vector<8x32xf32>
    %cst_60 = arith.constant 0.000000e+00 : f32
    %208 = vector.broadcast %cst_60 : f32 to vector<8x32xf32>
    %c0_i32_61 = arith.constant 0 : i32
    %c8_i32_62 = arith.constant 8 : i32
    %209 = arith.muli %c0_i32_61, %c8_i32_62 : i32
    %210 = tpu.assume_multiple %209, 8 : i32
    %211 = arith.index_cast %210 : i32 to index
    %c0_63 = arith.constant 0 : index
    %212 = vector.load %arg11[%211, %c0_63] : memref<64x128xf32, #tpu.memory_space<vmem>>, vector<8x128xf32>
    %cst_64 = arith.constant dense<0.000000e+00> : vector<8x128xf32>
    %213 = tpu.matmul %207, %200, %cst_64 {dimension_numbers = #tpu.dot_dimension_numbers<[1], [0], [0], [1], [0, 0, 1, 1], [], []>} : vector<8x32xf32>, vector<32x128xf32>, vector<8x128xf32> -> vector<8x128xf32>
    %214 = arith.addf %212, %213 : vector<8x128xf32>
    %215 = math.tanh %214 : vector<8x128xf32>
    %216 = vector.broadcast %8 : vector<1x128xf32> to vector<8x128xf32>
    %217 = arith.mulf %215, %216 : vector<8x128xf32>
    %218 = vector.broadcast %11 : vector<1x128xf32> to vector<8x128xf32>
    %219 = arith.addf %217, %218 : vector<8x128xf32>
    %220 = vector.extract_strided_slice %219 {offsets = [0, 0], sizes = [8, 32], strides = [1, 1]} : vector<8x128xf32> to vector<8x32xf32>
    %221 = vector.extract_strided_slice %219 {offsets = [0, 32], sizes = [8, 32], strides = [1, 1]} : vector<8x128xf32> to vector<8x32xf32>
    %222 = vector.extract_strided_slice %219 {offsets = [0, 64], sizes = [8, 32], strides = [1, 1]} : vector<8x128xf32> to vector<8x32xf32>
    %223 = vector.extract_strided_slice %219 {offsets = [0, 96], sizes = [8, 32], strides = [1, 1]} : vector<8x128xf32> to vector<8x32xf32>
    %224 = arith.mulf %221, %208 : vector<8x32xf32>
    %225 = arith.mulf %220, %222 : vector<8x32xf32>
    %226 = arith.addf %224, %225 : vector<8x32xf32>
    %227 = math.tanh %226 : vector<8x32xf32>
    %228 = arith.mulf %223, %227 : vector<8x32xf32>
    %c1_i32_65 = arith.constant 1 : i32
    %c8_i32_66 = arith.constant 8 : i32
    %229 = arith.muli %c1_i32_65, %c8_i32_66 : i32
    %230 = tpu.assume_multiple %229, 8 : i32
    %231 = arith.index_cast %230 : i32 to index
    %c0_67 = arith.constant 0 : index
    %232 = vector.load %arg11[%231, %c0_67] : memref<64x128xf32, #tpu.memory_space<vmem>>, vector<8x128xf32>
    %cst_68 = arith.constant dense<0.000000e+00> : vector<8x128xf32>
    %233 = tpu.matmul %228, %200, %cst_68 {dimension_numbers = #tpu.dot_dimension_numbers<[1], [0], [0], [1], [0, 0, 1, 1], [], []>} : vector<8x32xf32>, vector<32x128xf32>, vector<8x128xf32> -> vector<8x128xf32>
    %234 = arith.addf %232, %233 : vector<8x128xf32>
    %235 = math.tanh %234 : vector<8x128xf32>
    %236 = vector.broadcast %8 : vector<1x128xf32> to vector<8x128xf32>
    %237 = arith.mulf %235, %236 : vector<8x128xf32>
    %238 = vector.broadcast %11 : vector<1x128xf32> to vector<8x128xf32>
    %239 = arith.addf %237, %238 : vector<8x128xf32>
    %240 = vector.extract_strided_slice %239 {offsets = [0, 0], sizes = [8, 32], strides = [1, 1]} : vector<8x128xf32> to vector<8x32xf32>
    %241 = vector.extract_strided_slice %239 {offsets = [0, 32], sizes = [8, 32], strides = [1, 1]} : vector<8x128xf32> to vector<8x32xf32>
    %242 = vector.extract_strided_slice %239 {offsets = [0, 64], sizes = [8, 32], strides = [1, 1]} : vector<8x128xf32> to vector<8x32xf32>
    %243 = vector.extract_strided_slice %239 {offsets = [0, 96], sizes = [8, 32], strides = [1, 1]} : vector<8x128xf32> to vector<8x32xf32>
    %244 = arith.mulf %241, %226 : vector<8x32xf32>
    %245 = arith.mulf %240, %242 : vector<8x32xf32>
    %246 = arith.addf %244, %245 : vector<8x32xf32>
    %247 = math.tanh %246 : vector<8x32xf32>
    %248 = arith.mulf %243, %247 : vector<8x32xf32>
    %c2_i32_69 = arith.constant 2 : i32
    %c8_i32_70 = arith.constant 8 : i32
    %249 = arith.muli %c2_i32_69, %c8_i32_70 : i32
    %250 = tpu.assume_multiple %249, 8 : i32
    %251 = arith.index_cast %250 : i32 to index
    %c0_71 = arith.constant 0 : index
    %252 = vector.load %arg11[%251, %c0_71] : memref<64x128xf32, #tpu.memory_space<vmem>>, vector<8x128xf32>
    %cst_72 = arith.constant dense<0.000000e+00> : vector<8x128xf32>
    %253 = tpu.matmul %248, %200, %cst_72 {dimension_numbers = #tpu.dot_dimension_numbers<[1], [0], [0], [1], [0, 0, 1, 1], [], []>} : vector<8x32xf32>, vector<32x128xf32>, vector<8x128xf32> -> vector<8x128xf32>
    %254 = arith.addf %252, %253 : vector<8x128xf32>
    %255 = math.tanh %254 : vector<8x128xf32>
    %256 = vector.broadcast %8 : vector<1x128xf32> to vector<8x128xf32>
    %257 = arith.mulf %255, %256 : vector<8x128xf32>
    %258 = vector.broadcast %11 : vector<1x128xf32> to vector<8x128xf32>
    %259 = arith.addf %257, %258 : vector<8x128xf32>
    %260 = vector.extract_strided_slice %259 {offsets = [0, 0], sizes = [8, 32], strides = [1, 1]} : vector<8x128xf32> to vector<8x32xf32>
    %261 = vector.extract_strided_slice %259 {offsets = [0, 32], sizes = [8, 32], strides = [1, 1]} : vector<8x128xf32> to vector<8x32xf32>
    %262 = vector.extract_strided_slice %259 {offsets = [0, 64], sizes = [8, 32], strides = [1, 1]} : vector<8x128xf32> to vector<8x32xf32>
    %263 = vector.extract_strided_slice %259 {offsets = [0, 96], sizes = [8, 32], strides = [1, 1]} : vector<8x128xf32> to vector<8x32xf32>
    %264 = arith.mulf %261, %246 : vector<8x32xf32>
    %265 = arith.mulf %260, %262 : vector<8x32xf32>
    %266 = arith.addf %264, %265 : vector<8x32xf32>
    %267 = math.tanh %266 : vector<8x32xf32>
    %268 = arith.mulf %263, %267 : vector<8x32xf32>
    %c3_i32_73 = arith.constant 3 : i32
    %c8_i32_74 = arith.constant 8 : i32
    %269 = arith.muli %c3_i32_73, %c8_i32_74 : i32
    %270 = tpu.assume_multiple %269, 8 : i32
    %271 = arith.index_cast %270 : i32 to index
    %c0_75 = arith.constant 0 : index
    %272 = vector.load %arg11[%271, %c0_75] : memref<64x128xf32, #tpu.memory_space<vmem>>, vector<8x128xf32>
    %cst_76 = arith.constant dense<0.000000e+00> : vector<8x128xf32>
    %273 = tpu.matmul %268, %200, %cst_76 {dimension_numbers = #tpu.dot_dimension_numbers<[1], [0], [0], [1], [0, 0, 1, 1], [], []>} : vector<8x32xf32>, vector<32x128xf32>, vector<8x128xf32> -> vector<8x128xf32>
    %274 = arith.addf %272, %273 : vector<8x128xf32>
    %275 = math.tanh %274 : vector<8x128xf32>
    %276 = vector.broadcast %8 : vector<1x128xf32> to vector<8x128xf32>
    %277 = arith.mulf %275, %276 : vector<8x128xf32>
    %278 = vector.broadcast %11 : vector<1x128xf32> to vector<8x128xf32>
    %279 = arith.addf %277, %278 : vector<8x128xf32>
    %280 = vector.extract_strided_slice %279 {offsets = [0, 0], sizes = [8, 32], strides = [1, 1]} : vector<8x128xf32> to vector<8x32xf32>
    %281 = vector.extract_strided_slice %279 {offsets = [0, 32], sizes = [8, 32], strides = [1, 1]} : vector<8x128xf32> to vector<8x32xf32>
    %282 = vector.extract_strided_slice %279 {offsets = [0, 64], sizes = [8, 32], strides = [1, 1]} : vector<8x128xf32> to vector<8x32xf32>
    %283 = vector.extract_strided_slice %279 {offsets = [0, 96], sizes = [8, 32], strides = [1, 1]} : vector<8x128xf32> to vector<8x32xf32>
    %284 = arith.mulf %281, %266 : vector<8x32xf32>
    %285 = arith.mulf %280, %282 : vector<8x32xf32>
    %286 = arith.addf %284, %285 : vector<8x32xf32>
    %287 = math.tanh %286 : vector<8x32xf32>
    %288 = arith.mulf %283, %287 : vector<8x32xf32>
    %c4_i32_77 = arith.constant 4 : i32
    %c8_i32_78 = arith.constant 8 : i32
    %289 = arith.muli %c4_i32_77, %c8_i32_78 : i32
    %290 = tpu.assume_multiple %289, 8 : i32
    %291 = arith.index_cast %290 : i32 to index
    %c0_79 = arith.constant 0 : index
    %292 = vector.load %arg11[%291, %c0_79] : memref<64x128xf32, #tpu.memory_space<vmem>>, vector<8x128xf32>
    %cst_80 = arith.constant dense<0.000000e+00> : vector<8x128xf32>
    %293 = tpu.matmul %288, %200, %cst_80 {dimension_numbers = #tpu.dot_dimension_numbers<[1], [0], [0], [1], [0, 0, 1, 1], [], []>} : vector<8x32xf32>, vector<32x128xf32>, vector<8x128xf32> -> vector<8x128xf32>
    %294 = arith.addf %292, %293 : vector<8x128xf32>
    %295 = math.tanh %294 : vector<8x128xf32>
    %296 = vector.broadcast %8 : vector<1x128xf32> to vector<8x128xf32>
    %297 = arith.mulf %295, %296 : vector<8x128xf32>
    %298 = vector.broadcast %11 : vector<1x128xf32> to vector<8x128xf32>
    %299 = arith.addf %297, %298 : vector<8x128xf32>
    %300 = vector.extract_strided_slice %299 {offsets = [0, 0], sizes = [8, 32], strides = [1, 1]} : vector<8x128xf32> to vector<8x32xf32>
    %301 = vector.extract_strided_slice %299 {offsets = [0, 32], sizes = [8, 32], strides = [1, 1]} : vector<8x128xf32> to vector<8x32xf32>
    %302 = vector.extract_strided_slice %299 {offsets = [0, 64], sizes = [8, 32], strides = [1, 1]} : vector<8x128xf32> to vector<8x32xf32>
    %303 = vector.extract_strided_slice %299 {offsets = [0, 96], sizes = [8, 32], strides = [1, 1]} : vector<8x128xf32> to vector<8x32xf32>
    %304 = arith.mulf %301, %286 : vector<8x32xf32>
    %305 = arith.mulf %300, %302 : vector<8x32xf32>
    %306 = arith.addf %304, %305 : vector<8x32xf32>
    %307 = math.tanh %306 : vector<8x32xf32>
    %308 = arith.mulf %303, %307 : vector<8x32xf32>
    %c5_i32_81 = arith.constant 5 : i32
    %c8_i32_82 = arith.constant 8 : i32
    %309 = arith.muli %c5_i32_81, %c8_i32_82 : i32
    %310 = tpu.assume_multiple %309, 8 : i32
    %311 = arith.index_cast %310 : i32 to index
    %c0_83 = arith.constant 0 : index
    %312 = vector.load %arg11[%311, %c0_83] : memref<64x128xf32, #tpu.memory_space<vmem>>, vector<8x128xf32>
    %cst_84 = arith.constant dense<0.000000e+00> : vector<8x128xf32>
    %313 = tpu.matmul %308, %200, %cst_84 {dimension_numbers = #tpu.dot_dimension_numbers<[1], [0], [0], [1], [0, 0, 1, 1], [], []>} : vector<8x32xf32>, vector<32x128xf32>, vector<8x128xf32> -> vector<8x128xf32>
    %314 = arith.addf %312, %313 : vector<8x128xf32>
    %315 = math.tanh %314 : vector<8x128xf32>
    %316 = vector.broadcast %8 : vector<1x128xf32> to vector<8x128xf32>
    %317 = arith.mulf %315, %316 : vector<8x128xf32>
    %318 = vector.broadcast %11 : vector<1x128xf32> to vector<8x128xf32>
    %319 = arith.addf %317, %318 : vector<8x128xf32>
    %320 = vector.extract_strided_slice %319 {offsets = [0, 0], sizes = [8, 32], strides = [1, 1]} : vector<8x128xf32> to vector<8x32xf32>
    %321 = vector.extract_strided_slice %319 {offsets = [0, 32], sizes = [8, 32], strides = [1, 1]} : vector<8x128xf32> to vector<8x32xf32>
    %322 = vector.extract_strided_slice %319 {offsets = [0, 64], sizes = [8, 32], strides = [1, 1]} : vector<8x128xf32> to vector<8x32xf32>
    %323 = vector.extract_strided_slice %319 {offsets = [0, 96], sizes = [8, 32], strides = [1, 1]} : vector<8x128xf32> to vector<8x32xf32>
    %324 = arith.mulf %321, %306 : vector<8x32xf32>
    %325 = arith.mulf %320, %322 : vector<8x32xf32>
    %326 = arith.addf %324, %325 : vector<8x32xf32>
    %327 = math.tanh %326 : vector<8x32xf32>
    %328 = arith.mulf %323, %327 : vector<8x32xf32>
    %c6_i32_85 = arith.constant 6 : i32
    %c8_i32_86 = arith.constant 8 : i32
    %329 = arith.muli %c6_i32_85, %c8_i32_86 : i32
    %330 = tpu.assume_multiple %329, 8 : i32
    %331 = arith.index_cast %330 : i32 to index
    %c0_87 = arith.constant 0 : index
    %332 = vector.load %arg11[%331, %c0_87] : memref<64x128xf32, #tpu.memory_space<vmem>>, vector<8x128xf32>
    %cst_88 = arith.constant dense<0.000000e+00> : vector<8x128xf32>
    %333 = tpu.matmul %328, %200, %cst_88 {dimension_numbers = #tpu.dot_dimension_numbers<[1], [0], [0], [1], [0, 0, 1, 1], [], []>} : vector<8x32xf32>, vector<32x128xf32>, vector<8x128xf32> -> vector<8x128xf32>
    %334 = arith.addf %332, %333 : vector<8x128xf32>
    %335 = math.tanh %334 : vector<8x128xf32>
    %336 = vector.broadcast %8 : vector<1x128xf32> to vector<8x128xf32>
    %337 = arith.mulf %335, %336 : vector<8x128xf32>
    %338 = vector.broadcast %11 : vector<1x128xf32> to vector<8x128xf32>
    %339 = arith.addf %337, %338 : vector<8x128xf32>
    %340 = vector.extract_strided_slice %339 {offsets = [0, 0], sizes = [8, 32], strides = [1, 1]} : vector<8x128xf32> to vector<8x32xf32>
    %341 = vector.extract_strided_slice %339 {offsets = [0, 32], sizes = [8, 32], strides = [1, 1]} : vector<8x128xf32> to vector<8x32xf32>
    %342 = vector.extract_strided_slice %339 {offsets = [0, 64], sizes = [8, 32], strides = [1, 1]} : vector<8x128xf32> to vector<8x32xf32>
    %343 = vector.extract_strided_slice %339 {offsets = [0, 96], sizes = [8, 32], strides = [1, 1]} : vector<8x128xf32> to vector<8x32xf32>
    %344 = arith.mulf %341, %326 : vector<8x32xf32>
    %345 = arith.mulf %340, %342 : vector<8x32xf32>
    %346 = arith.addf %344, %345 : vector<8x32xf32>
    %347 = math.tanh %346 : vector<8x32xf32>
    %348 = arith.mulf %343, %347 : vector<8x32xf32>
    %c7_i32_89 = arith.constant 7 : i32
    %c8_i32_90 = arith.constant 8 : i32
    %349 = arith.muli %c7_i32_89, %c8_i32_90 : i32
    %350 = tpu.assume_multiple %349, 8 : i32
    %351 = arith.index_cast %350 : i32 to index
    %c0_91 = arith.constant 0 : index
    %352 = vector.load %arg11[%351, %c0_91] : memref<64x128xf32, #tpu.memory_space<vmem>>, vector<8x128xf32>
    %cst_92 = arith.constant dense<0.000000e+00> : vector<8x128xf32>
    %353 = tpu.matmul %348, %200, %cst_92 {dimension_numbers = #tpu.dot_dimension_numbers<[1], [0], [0], [1], [0, 0, 1, 1], [], []>} : vector<8x32xf32>, vector<32x128xf32>, vector<8x128xf32> -> vector<8x128xf32>
    %354 = arith.addf %352, %353 : vector<8x128xf32>
    %355 = math.tanh %354 : vector<8x128xf32>
    %356 = vector.broadcast %8 : vector<1x128xf32> to vector<8x128xf32>
    %357 = arith.mulf %355, %356 : vector<8x128xf32>
    %358 = vector.broadcast %11 : vector<1x128xf32> to vector<8x128xf32>
    %359 = arith.addf %357, %358 : vector<8x128xf32>
    %360 = vector.extract_strided_slice %359 {offsets = [0, 0], sizes = [8, 32], strides = [1, 1]} : vector<8x128xf32> to vector<8x32xf32>
    %361 = vector.extract_strided_slice %359 {offsets = [0, 32], sizes = [8, 32], strides = [1, 1]} : vector<8x128xf32> to vector<8x32xf32>
    %362 = vector.extract_strided_slice %359 {offsets = [0, 64], sizes = [8, 32], strides = [1, 1]} : vector<8x128xf32> to vector<8x32xf32>
    %363 = vector.extract_strided_slice %359 {offsets = [0, 96], sizes = [8, 32], strides = [1, 1]} : vector<8x128xf32> to vector<8x32xf32>
    %364 = arith.mulf %361, %346 : vector<8x32xf32>
    %365 = arith.mulf %360, %362 : vector<8x32xf32>
    %366 = arith.addf %364, %365 : vector<8x32xf32>
    %367 = math.tanh %366 : vector<8x32xf32>
    %368 = arith.mulf %363, %367 : vector<8x32xf32>
    %c8_i32_93 = arith.constant 8 : i32
    %c0_94 = arith.constant 0 : index
    %c0_95 = arith.constant 0 : index
    %369 = vector.load %arg8[%c0_94, %c0_95] : memref<32x128xf32, #tpu.memory_space<vmem>>, vector<32x128xf32>
    %cst_96 = arith.constant dense<0.000000e+00> : vector<8x128xf32>
    %370 = tpu.matmul %368, %369, %cst_96 {dimension_numbers = #tpu.dot_dimension_numbers<[1], [0], [0], [1], [0, 0, 1, 1], [], []>} : vector<8x32xf32>, vector<32x128xf32>, vector<8x128xf32> -> vector<8x128xf32>
    %c0_97 = arith.constant 0 : index
    %c0_98 = arith.constant 0 : index
    %371 = vector.load %arg9[%c0_97, %c0_98] : memref<1x128xf32, #tpu.memory_space<vmem>>, vector<1x128xf32>
    %372 = vector.broadcast %371 : vector<1x128xf32> to vector<8x128xf32>
    %373 = arith.addf %370, %372 : vector<8x128xf32>
    %c0_99 = arith.constant 0 : index
    %c0_100 = arith.constant 0 : index
    %374 = vector.load %arg10[%c0_99, %c0_100] : memref<8x128xf32, #tpu.memory_space<vmem>>, vector<8x128xf32>
    tpu.vector_store %arg10[%c0_99, %c0_100], %373 {strides = array<i32>} : memref<8x128xf32, #tpu.memory_space<vmem>>, vector<8x128xf32>,
    return
  }
  func.func @transform_0(%arg0: i32) -> (i32, i32, i32) {
    %c0_i32 = arith.constant 0 : i32
    %c0_i32_0 = arith.constant 0 : i32
    %c0_i32_1 = arith.constant 0 : i32
    return %arg0, %c0_i32, %c0_i32_0 : i32, i32, i32
  }
  func.func @transform_1(%arg0: i32) -> (i32, i32) {
    %c0_i32 = arith.constant 0 : i32
    %c0_i32_0 = arith.constant 0 : i32
    %c0_i32_1 = arith.constant 0 : i32
    return %c0_i32, %c0_i32_0 : i32, i32
  }
  func.func @transform_2(%arg0: i32) -> (i32, i32) {
    %c0_i32 = arith.constant 0 : i32
    %c0_i32_0 = arith.constant 0 : i32
    %c0_i32_1 = arith.constant 0 : i32
    return %c0_i32, %c0_i32_0 : i32, i32
  }
  func.func @transform_3(%arg0: i32) -> (i32, i32) {
    %c0_i32 = arith.constant 0 : i32
    %c0_i32_0 = arith.constant 0 : i32
    %c0_i32_1 = arith.constant 0 : i32
    return %c0_i32, %c0_i32_0 : i32, i32
  }
  func.func @transform_4(%arg0: i32) -> (i32, i32) {
    %c0_i32 = arith.constant 0 : i32
    %c0_i32_0 = arith.constant 0 : i32
    %c0_i32_1 = arith.constant 0 : i32
    return %c0_i32, %c0_i32_0 : i32, i32
  }
  func.func @transform_5(%arg0: i32) -> (i32, i32) {
    %c0_i32 = arith.constant 0 : i32
    %c0_i32_0 = arith.constant 0 : i32
    %c0_i32_1 = arith.constant 0 : i32
    return %c0_i32, %c0_i32_0 : i32, i32
  }
  func.func @transform_6(%arg0: i32) -> (i32, i32) {
    %c0_i32 = arith.constant 0 : i32
    %c0_i32_0 = arith.constant 0 : i32
    %c0_i32_1 = arith.constant 0 : i32
    return %c0_i32, %c0_i32_0 : i32, i32
  }
  func.func @transform_7(%arg0: i32) -> (i32, i32) {
    %c0_i32 = arith.constant 0 : i32
    %c0_i32_0 = arith.constant 0 : i32
    %c0_i32_1 = arith.constant 0 : i32
    return %c0_i32, %c0_i32_0 : i32, i32
  }
  func.func @transform_8(%arg0: i32) -> (i32, i32) {
    %c0_i32 = arith.constant 0 : i32
    %c0_i32_0 = arith.constant 0 : i32
    %c0_i32_1 = arith.constant 0 : i32
    return %c0_i32, %c0_i32_0 : i32, i32
  }
  func.func @transform_9(%arg0: i32) -> (i32, i32) {
    %c0_i32 = arith.constant 0 : i32
    %c0_i32_0 = arith.constant 0 : i32
    return %arg0, %c0_i32 : i32, i32
  }
}

</mosaic_0001>

<llo_original>
// kernel: tpu_custom_call.1
$region0: #{tpu_custom_call.1}
  #allocation0 [shape = 'u32[]', space=smem, size = 0x4, offset = 0x4, fixed_abs, tag = 'smem constant byte address 0x4 - core index']
  #allocation1 [shape = 'u32[144,128]{1,0:T(1,128)}', space=vmem, size = 0x12000, scoped, tag = 'internal scratch']
  #allocation2 [shape = 'f32[64,128]{1,0:T(8,128)}', space=vmem, size = 0x8000, scoped, tag = 'scratch operand']
  #allocation3 [shape = 'f32[64,32]{1,0:T(8,128)}', space=vmem, size = 0x8000, scoped, tag = 'scratch operand']
  %s0 = inlined_call_operand.vmem [shape: f32[1,64,16], index: 0, kind: input, shape index: {}]
  %s1 = inlined_call_operand.vmem [shape: f32[16,128], index: 1, kind: input, shape index: {}]
  %s2 = inlined_call_operand.vmem [shape: f32[32,128], index: 2, kind: input, shape index: {}]
  %s3 = inlined_call_operand.vmem [shape: f32[1,128], index: 3, kind: input, shape index: {}]
  %s4 = inlined_call_operand.vmem [shape: f32[32,128], index: 4, kind: input, shape index: {}]
  %s5 = inlined_call_operand.hbm [shape: f32[32,128], index: 5, kind: input, shape index: {}]
  %s6 = inlined_call_operand.vmem [shape: f32[1,128], index: 6, kind: input, shape index: {}]
  %s7 = inlined_call_operand.hbm [shape: f32[32,128], index: 7, kind: input, shape index: {}]
  %s8 = inlined_call_operand.vmem [shape: f32[1,128], index: 8, kind: input, shape index: {}]
  %s9 = inlined_call_operand.hbm [shape: f32[8,128], index: 9, kind: output, shape index: {}]
  %s10 = sld [smem:[#allocation0]]
  $region54: #{tpu_custom_call.1} parent=0
    _
  %s12 = ssub.s32 1, %s10
  %s13 = scalar_select 0, %s12, %s10
  $region1: #{tpu_custom_call.1} parent=0
    #allocation4 [shape = 'u8[16384]{0}', space=vmem, size = 0x4000, scoped, tag = 'input window, operand 5, single buffered']
    #allocation5 [shape = 's32[1]{0}', space=sflag, size = 0x4, scoped, tag = 'scoped memory for tpu_custom_call.1']
    #allocation6 [shape = 's32[1]{0}', space=sflag, size = 0x4, scoped, tag = 'scoped memory for tpu_custom_call.1']
    #allocation7 [shape = 'u8[16384]{0}', space=vmem, size = 0x4000, scoped, tag = 'input window, operand 7, single buffered']
    #allocation8 [shape = 's32[1]{0}', space=sflag, size = 0x4, scoped, tag = 'scoped memory for tpu_custom_call.1']
    #allocation9 [shape = 'u8[4096]{0}', space=vmem, size = 0x1000, scoped, tag = 'output window, operand 0, single buffered']
    %14 = vsyncpa [#allocation5], 0
    %15 = vsyncpa [#allocation8], 0
    %16 = vsyncpa [#allocation6], 0
    // Predicated region
    $region2: #{tpu_custom_call.1} parent=1 // pred_check
      _
    $region3: #{tpu_custom_call.1} parent=1 // pred_check_branch
      %18 = sbr.rel (0) target = $region5
    $region4: #{tpu_custom_call.1} parent=1 // pred_region
      _
    $region5: #{tpu_custom_call.1} parent=1 // pred_fallthru
      _
    // Predicated region
    $region6: #{tpu_custom_call.1} parent=1 // pred_check
      _
    $region7: #{tpu_custom_call.1} parent=1 // pred_check_branch
      %20 = sbr.rel (0) target = $region9
    $region8: #{tpu_custom_call.1} parent=1 // pred_region
      _
    $region9: #{tpu_custom_call.1} parent=1 // pred_fallthru
      _
    // Predicated region
    $region10: #{tpu_custom_call.1} parent=1 // pred_check
      _
    $region11: #{tpu_custom_call.1} parent=1 // pred_check_branch
      %22 = sbr.rel (0) target = $region13
    $region12: #{tpu_custom_call.1} parent=1 // pred_region
      _
    $region13: #{tpu_custom_call.1} parent=1 // pred_fallthru
      _
    // Predicated region
    $region14: #{tpu_custom_call.1} parent=1 // pred_check
      _
    $region15: #{tpu_custom_call.1} parent=1 // pred_check_branch
      %24 = sbr.rel (0) target = $region17
    $region16: #{tpu_custom_call.1} parent=1 // pred_region
      _
    $region17: #{tpu_custom_call.1} parent=1 // pred_fallthru
      _
    // Predicated region
    $region18: #{tpu_custom_call.1} parent=1 // pred_check
      _
    $region19: #{tpu_custom_call.1} parent=1 // pred_check_branch
      %26 = sbr.rel (0) target = $region21
    $region20: #{tpu_custom_call.1} parent=1 // pred_region
      _
    $region21: #{tpu_custom_call.1} parent=1 // pred_fallthru
      _
    // Predicated region
    $region22: #{tpu_custom_call.1} parent=1 // pred_check
      _
    $region23: #{tpu_custom_call.1} parent=1 // pred_check_branch
      %28 = sbr.rel (0) target = $region25
    $region24: #{tpu_custom_call.1} parent=1 // pred_region
      %s30 = ssub.s32 512, 512
      %31 = vsyncadd [#allocation5], %s30
      %s32 = sshll.u32 [#allocation4], 4
      %s33 = int_to_ptr.vmem [resolvable:$true] %s32
      %38 = dma.hbm_to_vmem [thread:$0]  %s5, 512, %s33, [#allocation5], 128, 128, 8
    $region25: #{tpu_custom_call.1} parent=1 // pred_fallthru
      _
    // Predicated region
    $region26: #{tpu_custom_call.1} parent=1 // pred_check
      _
    $region27: #{tpu_custom_call.1} parent=1 // pred_check_branch
      %40 = sbr.rel (0) target = $region29
    $region28: #{tpu_custom_call.1} parent=1 // pred_region
      _
    $region29: #{tpu_custom_call.1} parent=1 // pred_fallthru
      _
    // Predicated region
    $region30: #{tpu_custom_call.1} parent=1 // pred_check
      _
    $region31: #{tpu_custom_call.1} parent=1 // pred_check_branch
      %42 = sbr.rel (0) target = $region33
    $region32: #{tpu_custom_call.1} parent=1 // pred_region
      %s44 = ssub.s32 512, 512
      %45 = vsyncadd [#allocation8], %s44
      %s46 = sshll.u32 [#allocation7], 4
      %s47 = int_to_ptr.vmem [resolvable:$true] %s46
      %52 = dma.hbm_to_vmem [thread:$0]  %s7, 512, %s47, [#allocation8], 128, 128, 8
    $region33: #{tpu_custom_call.1} parent=1 // pred_fallthru
      _
    // Predicated region
    $region34: #{tpu_custom_call.1} parent=1 // pred_check
      _
    $region35: #{tpu_custom_call.1} parent=1 // pred_check_branch
      %54 = sbr.rel (0) target = $region37
    $region36: #{tpu_custom_call.1} parent=1 // pred_region
      _
    $region37: #{tpu_custom_call.1} parent=1 // pred_fallthru
      _
    // Predicated region
    $region38: #{tpu_custom_call.1} parent=1 // pred_check
      _
    $region39: #{tpu_custom_call.1} parent=1 // pred_check_branch
      %56 = sbr.rel (0) target = $region41
    $region40: #{tpu_custom_call.1} parent=1 // pred_region
      %57 = dma.done [#allocation5], 512
    $region41: #{tpu_custom_call.1} parent=1 // pred_fallthru
      _
    // Predicated region
    $region42: #{tpu_custom_call.1} parent=1 // pred_check
      _
    $region43: #{tpu_custom_call.1} parent=1 // pred_check_branch
      %59 = sbr.rel (0) target = $region45
    $region44: #{tpu_custom_call.1} parent=1 // pred_region
      %60 = dma.done [#allocation8], 512
    $region45: #{tpu_custom_call.1} parent=1 // pred_fallthru
      _
    %v61 = vlaneseq
    %v62 = vand.u32 %v61, 127
    %vm63 = vcmp.ge.s32.totalorder %v62, 64
    %vm64 = vcmp.lt.s32.totalorder %v62, 96
    %vm65 = vmand %vm63, %vm64
    %v66 = vsel %vm65, 1.0, 0.5
    %v67 = vsel %vm65, 0.0, 0.5
    %v68 = vld [vmem:[%s1] sm:$0xff]
    %v69 = vld [vmem:[%s1 + $0x8] sm:$0xff]
    %v70 = vld [vmem:[%s2] sm:$0xff]
    %v71 = vld [vmem:[%s2 + $0x8] sm:$0xff]
    %v72 = vld [vmem:[%s2 + $0x10] sm:$0xff]
    %v73 = vld [vmem:[%s2 + $0x18] sm:$0xff]
    %v74 = vld [vmem:[%s3] sm:$0x1]
    %v75 = vld [vmem:[%s0] sm:$0xff]
    %v76 = vld [vmem:[%s0 + $0x8] sm:$0xff]
    %v77 = vld [vmem:[%s0 + $0x10] sm:$0xff]
    %v78 = vld [vmem:[%s0 + $0x18] sm:$0xff]
    %v79 = vld [vmem:[%s0 + $0x20] sm:$0xff]
    %v80 = vld [vmem:[%s0 + $0x28] sm:$0xff]
    %v81 = vld [vmem:[%s0 + $0x30] sm:$0xff]
    %v82 = vld [vmem:[%s0 + $0x38] sm:$0xff]
    %v84 = vlaneseq
    %v85 = vshrl.u32 %v84, 7
    %v86 = vsub.s32 0, %v85
    %v87 = vrot.slane %v74, %v86
    %vm89 = vcmask 130048
    %v91 = vsel %vm89, %v75, 0
    %v94 = vsel %vm89, %v76, 0
    %v97 = vsel %vm89, %v77, 0
    %v100 = vsel %vm89, %v78, 0
    %v103 = vsel %vm89, %v79, 0
    %v106 = vsel %vm89, %v80, 0
    %v109 = vsel %vm89, %v81, 0
    %v112 = vsel %vm89, %v82, 0
    %114 = vmatprep.subr.mxu0 0.0
    %115 = vmatpush1.msra.mxu0 0.0
    %116 = vmatprep.subr.mxu0 0.0
    %117 = vmatpush1.msra.mxu0 0.0
    %118 = vmatprep.subr.mxu0 0.0
    %119 = vmatpush1.msra.mxu0 0.0
    %120 = vmatprep.subr.mxu0 0.0
    %121 = vmatpush1.msra.mxu0 0.0
    %122 = vmatprep.subr.mxu0 0.0
    %123 = vmatpush1.msra.mxu0 0.0
    %124 = vmatprep.subr.mxu0 0.0
    %125 = vmatpush1.msra.mxu0 0.0
    %126 = vmatprep.subr.mxu0 0.0
    %127 = vmatpush1.msra.mxu0 0.0
    %128 = vmatprep.subr.mxu0 0.0
    %129 = vmatpush1.msra.mxu0 0.0
    %130 = vmatprep.subr.mxu0 0.0
    %131 = vmatpush1.msra.mxu0 0.0
    %132 = vmatprep.subr.mxu0 0.0
    %133 = vmatpush1.msra.mxu0 0.0
    %134 = vmatprep.subr.mxu0 0.0
    %135 = vmatpush1.msra.mxu0 0.0
    %136 = vmatprep.subr.mxu0 0.0
    %137 = vmatpush1.msra.mxu0 0.0
    %138 = vmatprep.subr.mxu0 0.0
    %139 = vmatpush1.msra.mxu0 0.0
    %140 = vmatprep.subr.mxu0 0.0
    %141 = vmatpush1.msra.mxu0 0.0
    %142 = vmatprep.subr.mxu0 0.0
    %143 = vmatpush1.msra.mxu0 %v69
    %144 = vmatprep.subr.mxu0 0.0
    %145 = vmatpush1.msra.mxu0 %v68
    %146 = vmatprep.subr.mxu0 0.0
    %147 = vmatpush2.msra.mxu0 0.0
    %148 = vmatprep.subr.mxu0 0.0
    %149 = vmatpush2.msra.mxu0 0.0
    %150 = vmatprep.subr.mxu0 0.0
    %151 = vmatpush2.msra.mxu0 0.0
    %152 = vmatprep.subr.mxu0 0.0
    %153 = vmatpush2.msra.mxu0 0.0
    %154 = vmatprep.subr.mxu0 0.0
    %155 = vmatpush2.msra.mxu0 0.0
    %156 = vmatprep.subr.mxu0 0.0
    %157 = vmatpush2.msra.mxu0 0.0
    %158 = vmatprep.subr.mxu0 0.0
    %159 = vmatpush2.msra.mxu0 0.0
    %160 = vmatprep.subr.mxu0 0.0
    %161 = vmatpush2.msra.mxu0 0.0
    %162 = vmatprep.subr.mxu0 0.0
    %163 = vmatpush2.msra.mxu0 0.0
    %164 = vmatprep.subr.mxu0 0.0
    %165 = vmatpush2.msra.mxu0 0.0
    %166 = vmatprep.subr.mxu0 0.0
    %167 = vmatpush2.msra.mxu0 0.0
    %168 = vmatprep.subr.mxu0 0.0
    %169 = vmatpush2.msra.mxu0 0.0
    %170 = vmatprep.subr.mxu0 0.0
    %171 = vmatpush2.msra.mxu0 0.0
    %172 = vmatprep.subr.mxu0 0.0
    %173 = vmatpush2.msra.mxu0 0.0
    %174 = vmatprep.subr.mxu0 0.0
    %175 = vmatpush2.msra.mxu0 0.0
    %176 = vmatprep.subr.mxu0 0.0
    %177 = vmatpush2.msra.mxu0 0.0
    %178 = vmatprep.mubr.f32.mxu0 0.0
    %179 = vmatmul.mubr.f32.gmra.mxu0 %v91
    %v180 = vpop.f32.mrf.mxu0
    %v181 = vadd.f32 %v87, %v180
    %v182 = vpop.f32.mrf.mxu0
    %183 = vmatprep.mubr.f32.mxu0 0.0
    %184 = vmatmul.mubr.f32.gmra.mxu0 %v94
    %v185 = vpop.f32.mrf.mxu0
    %v186 = vadd.f32 %v87, %v185
    %v187 = vpop.f32.mrf.mxu0
    %188 = vmatprep.mubr.f32.mxu0 0.0
    %189 = vmatmul.mubr.f32.gmra.mxu0 %v97
    %v190 = vpop.f32.mrf.mxu0
    %v191 = vadd.f32 %v87, %v190
    %v192 = vpop.f32.mrf.mxu0
    %193 = vmatprep.mubr.f32.mxu0 0.0
    %194 = vmatmul.mubr.f32.gmra.mxu0 %v100
    %v195 = vpop.f32.mrf.mxu0
    %v196 = vadd.f32 %v87, %v195
    %v197 = vpop.f32.mrf.mxu0
    %198 = vmatprep.mubr.f32.mxu0 0.0
    %199 = vmatmul.mubr.f32.gmra.mxu0 %v103
    %v200 = vpop.f32.mrf.mxu0
    %v201 = vadd.f32 %v87, %v200
    %v202 = vpop.f32.mrf.mxu0
    %203 = vmatprep.mubr.f32.mxu0 0.0
    %204 = vmatmul.mubr.f32.gmra.mxu0 %v106
    %v205 = vpop.f32.mrf.mxu0
    %v206 = vadd.f32 %v87, %v205
    %v207 = vpop.f32.mrf.mxu0
    %208 = vmatprep.mubr.f32.mxu0 0.0
    %209 = vmatmul.mubr.f32.gmra.mxu0 %v109
    %v210 = vpop.f32.mrf.mxu0
    %v211 = vadd.f32 %v87, %v210
    %v212 = vpop.f32.mrf.mxu0
    %213 = vmatprep.mubr.f32.mxu0 0.0
    %214 = vmatmul.mubr.f32.gmra.mxu0 %v112
    %v215 = vpop.f32.mrf.mxu0
    %v216 = vadd.f32 %v87, %v215
    %v217 = vpop.f32.mrf.mxu0
    %218 = vdwg.mxu0
    %219 = vst [vmem:[#allocation2] sm:$0xff] %v181
    %220 = vst [vmem:[#allocation2 + $0x8] sm:$0xff] %v186
    %221 = vst [vmem:[#allocation2 + $0x10] sm:$0xff] %v191
    %222 = vst [vmem:[#allocation2 + $0x18] sm:$0xff] %v196
    %223 = vst [vmem:[#allocation2 + $0x20] sm:$0xff] %v201
    %224 = vst [vmem:[#allocation2 + $0x28] sm:$0xff] %v206
    %225 = vst [vmem:[#allocation2 + $0x30] sm:$0xff] %v211
    %226 = vst [vmem:[#allocation2 + $0x38] sm:$0xff] %v216
    %v227 = vld [vmem:[#allocation2] sm:$0xff]
    %vm228 = vcmask 261120
    %v230 = vsel %vm228, 0.0, 0
    %232 = vmatprep.subr.mxu0 0.0
    %233 = vmatpush1.msra.mxu0 0.0
    %234 = vmatprep.subr.mxu0 0.0
    %235 = vmatpush1.msra.mxu0 0.0
    %236 = vmatprep.subr.mxu0 0.0
    %237 = vmatpush1.msra.mxu0 0.0
    %238 = vmatprep.subr.mxu0 0.0
    %239 = vmatpush1.msra.mxu0 0.0
    %240 = vmatprep.subr.mxu0 0.0
    %241 = vmatpush1.msra.mxu0 0.0
    %242 = vmatprep.subr.mxu0 0.0
    %243 = vmatpush1.msra.mxu0 0.0
    %244 = vmatprep.subr.mxu0 0.0
    %245 = vmatpush1.msra.mxu0 0.0
    %246 = vmatprep.subr.mxu0 0.0
    %247 = vmatpush1.msra.mxu0 0.0
    %248 = vmatprep.subr.mxu0 0.0
    %249 = vmatpush1.msra.mxu0 0.0
    %250 = vmatprep.subr.mxu0 0.0
    %251 = vmatpush1.msra.mxu0 0.0
    %252 = vmatprep.subr.mxu0 0.0
    %253 = vmatpush1.msra.mxu0 0.0
    %254 = vmatprep.subr.mxu0 0.0
    %255 = vmatpush1.msra.mxu0 0.0
    %256 = vmatprep.subr.mxu0 0.0
    %257 = vmatpush1.msra.mxu0 %v73
    %258 = vmatprep.subr.mxu0 0.0
    %259 = vmatpush1.msra.mxu0 %v72
    %260 = vmatprep.subr.mxu0 0.0
    %261 = vmatpush1.msra.mxu0 %v71
    %262 = vmatprep.subr.mxu0 0.0
    %263 = vmatpush1.msra.mxu0 %v70
    %264 = vmatprep.subr.mxu0 0.0
    %265 = vmatpush2.msra.mxu0 0.0
    %266 = vmatprep.subr.mxu0 0.0
    %267 = vmatpush2.msra.mxu0 0.0
    %268 = vmatprep.subr.mxu0 0.0
    %269 = vmatpush2.msra.mxu0 0.0
    %270 = vmatprep.subr.mxu0 0.0
    %271 = vmatpush2.msra.mxu0 0.0
    %272 = vmatprep.subr.mxu0 0.0
    %273 = vmatpush2.msra.mxu0 0.0
    %274 = vmatprep.subr.mxu0 0.0
    %275 = vmatpush2.msra.mxu0 0.0
    %276 = vmatprep.subr.mxu0 0.0
    %277 = vmatpush2.msra.mxu0 0.0
    %278 = vmatprep.subr.mxu0 0.0
    %279 = vmatpush2.msra.mxu0 0.0
    %280 = vmatprep.subr.mxu0 0.0
    %281 = vmatpush2.msra.mxu0 0.0
    %282 = vmatprep.subr.mxu0 0.0
    %283 = vmatpush2.msra.mxu0 0.0
    %284 = vmatprep.subr.mxu0 0.0
    %285 = vmatpush2.msra.mxu0 0.0
    %286 = vmatprep.subr.mxu0 0.0
    %287 = vmatpush2.msra.mxu0 0.0
    %288 = vmatprep.subr.mxu0 0.0
    %289 = vmatpush2.msra.mxu0 0.0
    %290 = vmatprep.subr.mxu0 0.0
    %291 = vmatpush2.msra.mxu0 0.0
    %292 = vmatprep.subr.mxu0 0.0
    %293 = vmatpush2.msra.mxu0 0.0
    %294 = vmatprep.subr.mxu0 0.0
    %295 = vmatpush2.msra.mxu0 0.0
    %296 = vmatprep.mubr.f32.mxu0 0.0
    %297 = vmatmul.mubr.f32.gmra.mxu0 %v230
    %v298 = vpop.f32.mrf.mxu0
    %v299 = vadd.f32 0.0, %v298
    %v300 = vpop.f32.mrf.mxu0
    %301 = vdwg.mxu0
    %v302 = vadd.f32 %v227, %v299
    %v303 = vtanh.pop %v302
    %v304 = vmul.f32 %v303, %v66
    %v305 = vadd.f32 %v304, %v67
    %v306 = vmul.f32 %v305, 0.0
    %308 = vrot.lane.b32.xlu0 %v305, 64
    %v309 = vpop.permute.xlu0 %308
    %v311 = vmul.f32 %v305, %v309
    %313 = vrot.lane.b32.xlu0 %v311, 32
    %v314 = vpop.permute.xlu0 %313
    %v316 = vadd.f32 %v306, %v314
    %v317 = vtanh.pop %v316
    %319 = vrot.lane.b32.xlu0 %v317, 64
    %v320 = vpop.permute.xlu0 %319
    %v322 = vmul.f32 %v305, %v320
    %324 = vrot.lane.b32.xlu0 %v322, 32
    %v325 = vpop.permute.xlu0 %324
    %327 = vst.msk [vmem:[#allocation3] sm:$0xff] %vm228, %v325
    %s328 = scalar_lea.vmem [#allocation2], 8
    %v329 = vld [vmem:[%s328] sm:$0xff]
    %v330 = vsel %vm228, %v325, 0
    %332 = vmatprep.subr.mxu0 0.0
    %333 = vmatpush1.msra.mxu0 0.0
    %334 = vmatprep.subr.mxu0 0.0
    %335 = vmatpush1.msra.mxu0 0.0
    %336 = vmatprep.subr.mxu0 0.0
    %337 = vmatpush1.msra.mxu0 0.0
    %338 = vmatprep.subr.mxu0 0.0
    %339 = vmatpush1.msra.mxu0 0.0
    %340 = vmatprep.subr.mxu0 0.0
    %341 = vmatpush1.msra.mxu0 0.0
    %342 = vmatprep.subr.mxu0 0.0
    %343 = vmatpush1.msra.mxu0 0.0
    %344 = vmatprep.subr.mxu0 0.0
    %345 = vmatpush1.msra.mxu0 0.0
    %346 = vmatprep.subr.mxu0 0.0
    %347 = vmatpush1.msra.mxu0 0.0
    %348 = vmatprep.subr.mxu0 0.0
    %349 = vmatpush1.msra.mxu0 0.0
    %350 = vmatprep.subr.mxu0 0.0
    %351 = vmatpush1.msra.mxu0 0.0
    %352 = vmatprep.subr.mxu0 0.0
    %353 = vmatpush1.msra.mxu0 0.0
    %354 = vmatprep.subr.mxu0 0.0
    %355 = vmatpush1.msra.mxu0 0.0
    %356 = vmatprep.subr.mxu0 0.0
    %357 = vmatpush1.msra.mxu0 %v73
    %358 = vmatprep.subr.mxu0 0.0
    %359 = vmatpush1.msra.mxu0 %v72
    %360 = vmatprep.subr.mxu0 0.0
    %361 = vmatpush1.msra.mxu0 %v71
    %362 = vmatprep.subr.mxu0 0.0
    %363 = vmatpush1.msra.mxu0 %v70
    %364 = vmatprep.subr.mxu0 0.0
    %365 = vmatpush2.msra.mxu0 0.0
    %366 = vmatprep.subr.mxu0 0.0
    %367 = vmatpush2.msra.mxu0 0.0
    %368 = vmatprep.subr.mxu0 0.0
    %369 = vmatpush2.msra.mxu0 0.0
    %370 = vmatprep.subr.mxu0 0.0
    %371 = vmatpush2.msra.mxu0 0.0
    %372 = vmatprep.subr.mxu0 0.0
    %373 = vmatpush2.msra.mxu0 0.0
    %374 = vmatprep.subr.mxu0 0.0
    %375 = vmatpush2.msra.mxu0 0.0
    %376 = vmatprep.subr.mxu0 0.0
    %377 = vmatpush2.msra.mxu0 0.0
    %378 = vmatprep.subr.mxu0 0.0
    %379 = vmatpush2.msra.mxu0 0.0
    %380 = vmatprep.subr.mxu0 0.0
    %381 = vmatpush2.msra.mxu0 0.0
    %382 = vmatprep.subr.mxu0 0.0
    %383 = vmatpush2.msra.mxu0 0.0
    %384 = vmatprep.subr.mxu0 0.0
    %385 = vmatpush2.msra.mxu0 0.0
    %386 = vmatprep.subr.mxu0 0.0
    %387 = vmatpush2.msra.mxu0 0.0
    %388 = vmatprep.subr.mxu0 0.0
    %389 = vmatpush2.msra.mxu0 0.0
    %390 = vmatprep.subr.mxu0 0.0
    %391 = vmatpush2.msra.mxu0 0.0
    %392 = vmatprep.subr.mxu0 0.0
    %393 = vmatpush2.msra.mxu0 0.0
    %394 = vmatprep.subr.mxu0 0.0
    %395 = vmatpush2.msra.mxu0 0.0
    %396 = vmatprep.mubr.f32.mxu0 0.0
    %397 = vmatmul.mubr.f32.gmra.mxu0 %v330
    %v398 = vpop.f32.mrf.mxu0
    %v399 = vadd.f32 0.0, %v398
    %v400 = vpop.f32.mrf.mxu0
    %401 = vdwg.mxu0
    %v402 = vadd.f32 %v329, %v399
    %v403 = vtanh.pop %v402
    %v404 = vmul.f32 %v403, %v66
    %v405 = vadd.f32 %v404, %v67
    %v406 = vmul.f32 %v405, %v316
    %408 = vrot.lane.b32.xlu0 %v405, 64
    %v409 = vpop.permute.xlu0 %408
    %v411 = vmul.f32 %v405, %v409
    %413 = vrot.lane.b32.xlu0 %v411, 32
    %v414 = vpop.permute.xlu0 %413
    %v416 = vadd.f32 %v406, %v414
    %v417 = vtanh.pop %v416
    %419 = vrot.lane.b32.xlu0 %v417, 64
    %v420 = vpop.permute.xlu0 %419
    %v422 = vmul.f32 %v405, %v420
    %424 = vrot.lane.b32.xlu0 %v422, 32
    %v425 = vpop.permute.xlu0 %424
    %s427 = scalar_lea.vmem [#allocation3], 8
    %428 = vst.msk [vmem:[%s427] sm:$0xff] %vm228, %v425
    %s429 = scalar_lea.vmem [#allocation2], 16
    %v430 = vld [vmem:[%s429] sm:$0xff]
    %v431 = vsel %vm228, %v425, 0
    %433 = vmatprep.subr.mxu0 0.0
    %434 = vmatpush1.msra.mxu0 0.0
    %435 = vmatprep.subr.mxu0 0.0
    %436 = vmatpush1.msra.mxu0 0.0
    %437 = vmatprep.subr.mxu0 0.0
    %438 = vmatpush1.msra.mxu0 0.0
    %439 = vmatprep.subr.mxu0 0.0
    %440 = vmatpush1.msra.mxu0 0.0
    %441 = vmatprep.subr.mxu0 0.0
    %442 = vmatpush1.msra.mxu0 0.0
    %443 = vmatprep.subr.mxu0 0.0
    %444 = vmatpush1.msra.mxu0 0.0
    %445 = vmatprep.subr.mxu0 0.0
    %446 = vmatpush1.msra.mxu0 0.0
    %447 = vmatprep.subr.mxu0 0.0
    %448 = vmatpush1.msra.mxu0 0.0
    %449 = vmatprep.subr.mxu0 0.0
    %450 = vmatpush1.msra.mxu0 0.0
    %451 = vmatprep.subr.mxu0 0.0
    %452 = vmatpush1.msra.mxu0 0.0
    %453 = vmatprep.subr.mxu0 0.0
    %454 = vmatpush1.msra.mxu0 0.0
    %455 = vmatprep.subr.mxu0 0.0
    %456 = vmatpush1.msra.mxu0 0.0
    %457 = vmatprep.subr.mxu0 0.0
    %458 = vmatpush1.msra.mxu0 %v73
    %459 = vmatprep.subr.mxu0 0.0
    %460 = vmatpush1.msra.mxu0 %v72
    %461 = vmatprep.subr.mxu0 0.0
    %462 = vmatpush1.msra.mxu0 %v71
    %463 = vmatprep.subr.mxu0 0.0
    %464 = vmatpush1.msra.mxu0 %v70
    %465 = vmatprep.subr.mxu0 0.0
    %466 = vmatpush2.msra.mxu0 0.0
    %467 = vmatprep.subr.mxu0 0.0
    %468 = vmatpush2.msra.mxu0 0.0
    %469 = vmatprep.subr.mxu0 0.0
    %470 = vmatpush2.msra.mxu0 0.0
    %471 = vmatprep.subr.mxu0 0.0
    %472 = vmatpush2.msra.mxu0 0.0
    %473 = vmatprep.subr.mxu0 0.0
    %474 = vmatpush2.msra.mxu0 0.0
    %475 = vmatprep.subr.mxu0 0.0
    %476 = vmatpush2.msra.mxu0 0.0
    %477 = vmatprep.subr.mxu0 0.0
    %478 = vmatpush2.msra.mxu0 0.0
    %479 = vmatprep.subr.mxu0 0.0
    %480 = vmatpush2.msra.mxu0 0.0
    %481 = vmatprep.subr.mxu0 0.0
    %482 = vmatpush2.msra.mxu0 0.0
    %483 = vmatprep.subr.mxu0 0.0
    %484 = vmatpush2.msra.mxu0 0.0
    %485 = vmatprep.subr.mxu0 0.0
    %486 = vmatpush2.msra.mxu0 0.0
    %487 = vmatprep.subr.mxu0 0.0
    %488 = vmatpush2.msra.mxu0 0.0
    %489 = vmatprep.subr.mxu0 0.0
    %490 = vmatpush2.msra.mxu0 0.0
    %491 = vmatprep.subr.mxu0 0.0
    %492 = vmatpush2.msra.mxu0 0.0
    %493 = vmatprep.subr.mxu0 0.0
    %494 = vmatpush2.msra.mxu0 0.0
    %495 = vmatprep.subr.mxu0 0.0
    %496 = vmatpush2.msra.mxu0 0.0
    %497 = vmatprep.mubr.f32.mxu0 0.0
    %498 = vmatmul.mubr.f32.gmra.mxu0 %v431
    %v499 = vpop.f32.mrf.mxu0
    %v500 = vadd.f32 0.0, %v499
    %v501 = vpop.f32.mrf.mxu0
    %502 = vdwg.mxu0
    %v503 = vadd.f32 %v430, %v500
    %v504 = vtanh.pop %v503
    %v505 = vmul.f32 %v504, %v66
    %v506 = vadd.f32 %v505, %v67
    %v507 = vmul.f32 %v506, %v416
    %509 = vrot.lane.b32.xlu0 %v506, 64
    %v510 = vpop.permute.xlu0 %509
    %v512 = vmul.f32 %v506, %v510
    %514 = vrot.lane.b32.xlu0 %v512, 32
    %v515 = vpop.permute.xlu0 %514
    %v517 = vadd.f32 %v507, %v515
    %v518 = vtanh.pop %v517
    %520 = vrot.lane.b32.xlu0 %v518, 64
    %v521 = vpop.permute.xlu0 %520
    %v523 = vmul.f32 %v506, %v521
    %525 = vrot.lane.b32.xlu0 %v523, 32
    %v526 = vpop.permute.xlu0 %525
    %s528 = scalar_lea.vmem [#allocation3], 16
    %529 = vst.msk [vmem:[%s528] sm:$0xff] %vm228, %v526
    %s530 = scalar_lea.vmem [#allocation2], 24
    %v531 = vld [vmem:[%s530] sm:$0xff]
    %v532 = vsel %vm228, %v526, 0
    %534 = vmatprep.subr.mxu0 0.0
    %535 = vmatpush1.msra.mxu0 0.0
    %536 = vmatprep.subr.mxu0 0.0
    %537 = vmatpush1.msra.mxu0 0.0
    %538 = vmatprep.subr.mxu0 0.0
    %539 = vmatpush1.msra.mxu0 0.0
    %540 = vmatprep.subr.mxu0 0.0
    %541 = vmatpush1.msra.mxu0 0.0
    %542 = vmatprep.subr.mxu0 0.0
    %543 = vmatpush1.msra.mxu0 0.0
    %544 = vmatprep.subr.mxu0 0.0
    %545 = vmatpush1.msra.mxu0 0.0
    %546 = vmatprep.subr.mxu0 0.0
    %547 = vmatpush1.msra.mxu0 0.0
    %548 = vmatprep.subr.mxu0 0.0
    %549 = vmatpush1.msra.mxu0 0.0
    %550 = vmatprep.subr.mxu0 0.0
    %551 = vmatpush1.msra.mxu0 0.0
    %552 = vmatprep.subr.mxu0 0.0
    %553 = vmatpush1.msra.mxu0 0.0
    %554 = vmatprep.subr.mxu0 0.0
    %555 = vmatpush1.msra.mxu0 0.0
    %556 = vmatprep.subr.mxu0 0.0
    %557 = vmatpush1.msra.mxu0 0.0
    %558 = vmatprep.subr.mxu0 0.0
    %559 = vmatpush1.msra.mxu0 %v73
    %560 = vmatprep.subr.mxu0 0.0
    %561 = vmatpush1.msra.mxu0 %v72
    %562 = vmatprep.subr.mxu0 0.0
    %563 = vmatpush1.msra.mxu0 %v71
    %564 = vmatprep.subr.mxu0 0.0
    %565 = vmatpush1.msra.mxu0 %v70
    %566 = vmatprep.subr.mxu0 0.0
    %567 = vmatpush2.msra.mxu0 0.0
    %568 = vmatprep.subr.mxu0 0.0
    %569 = vmatpush2.msra.mxu0 0.0
    %570 = vmatprep.subr.mxu0 0.0
    %571 = vmatpush2.msra.mxu0 0.0
    %572 = vmatprep.subr.mxu0 0.0
    %573 = vmatpush2.msra.mxu0 0.0
    %574 = vmatprep.subr.mxu0 0.0
    %575 = vmatpush2.msra.mxu0 0.0
    %576 = vmatprep.subr.mxu0 0.0
    %577 = vmatpush2.msra.mxu0 0.0
    %578 = vmatprep.subr.mxu0 0.0
    %579 = vmatpush2.msra.mxu0 0.0
    %580 = vmatprep.subr.mxu0 0.0
    %581 = vmatpush2.msra.mxu0 0.0
    %582 = vmatprep.subr.mxu0 0.0
    %583 = vmatpush2.msra.mxu0 0.0
    %584 = vmatprep.subr.mxu0 0.0
    %585 = vmatpush2.msra.mxu0 0.0
    %586 = vmatprep.subr.mxu0 0.0
    %587 = vmatpush2.msra.mxu0 0.0
    %588 = vmatprep.subr.mxu0 0.0
    %589 = vmatpush2.msra.mxu0 0.0
    %590 = vmatprep.subr.mxu0 0.0
    %591 = vmatpush2.msra.mxu0 0.0
    %592 = vmatprep.subr.mxu0 0.0
    %593 = vmatpush2.msra.mxu0 0.0
    %594 = vmatprep.subr.mxu0 0.0
    %595 = vmatpush2.msra.mxu0 0.0
    %596 = vmatprep.subr.mxu0 0.0
    %597 = vmatpush2.msra.mxu0 0.0
    %598 = vmatprep.mubr.f32.mxu0 0.0
    %599 = vmatmul.mubr.f32.gmra.mxu0 %v532
    %v600 = vpop.f32.mrf.mxu0
    %v601 = vadd.f32 0.0, %v600
    %v602 = vpop.f32.mrf.mxu0
    %603 = vdwg.mxu0
    %v604 = vadd.f32 %v531, %v601
    %v605 = vtanh.pop %v604
    %v606 = vmul.f32 %v605, %v66
    %v607 = vadd.f32 %v606, %v67
    %v608 = vmul.f32 %v607, %v517
    %610 = vrot.lane.b32.xlu0 %v607, 64
    %v611 = vpop.permute.xlu0 %610
    %v613 = vmul.f32 %v607, %v611
    %615 = vrot.lane.b32.xlu0 %v613, 32
    %v616 = vpop.permute.xlu0 %615
    %v618 = vadd.f32 %v608, %v616
    %v619 = vtanh.pop %v618
    %621 = vrot.lane.b32.xlu0 %v619, 64
    %v622 = vpop.permute.xlu0 %621
    %v624 = vmul.f32 %v607, %v622
    %626 = vrot.lane.b32.xlu0 %v624, 32
    %v627 = vpop.permute.xlu0 %626
    %s629 = scalar_lea.vmem [#allocation3], 24
    %630 = vst.msk [vmem:[%s629] sm:$0xff] %vm228, %v627
    %s631 = scalar_lea.vmem [#allocation2], 32
    %v632 = vld [vmem:[%s631] sm:$0xff]
    %v633 = vsel %vm228, %v627, 0
    %635 = vmatprep.subr.mxu0 0.0
    %636 = vmatpush1.msra.mxu0 0.0
    %637 = vmatprep.subr.mxu0 0.0
    %638 = vmatpush1.msra.mxu0 0.0
    %639 = vmatprep.subr.mxu0 0.0
    %640 = vmatpush1.msra.mxu0 0.0
    %641 = vmatprep.subr.mxu0 0.0
    %642 = vmatpush1.msra.mxu0 0.0
    %643 = vmatprep.subr.mxu0 0.0
    %644 = vmatpush1.msra.mxu0 0.0
    %645 = vmatprep.subr.mxu0 0.0
    %646 = vmatpush1.msra.mxu0 0.0
    %647 = vmatprep.subr.mxu0 0.0
    %648 = vmatpush1.msra.mxu0 0.0
    %649 = vmatprep.subr.mxu0 0.0
    %650 = vmatpush1.msra.mxu0 0.0
    %651 = vmatprep.subr.mxu0 0.0
    %652 = vmatpush1.msra.mxu0 0.0
    %653 = vmatprep.subr.mxu0 0.0
    %654 = vmatpush1.msra.mxu0 0.0
    %655 = vmatprep.subr.mxu0 0.0
    %656 = vmatpush1.msra.mxu0 0.0
    %657 = vmatprep.subr.mxu0 0.0
    %658 = vmatpush1.msra.mxu0 0.0
    %659 = vmatprep.subr.mxu0 0.0
    %660 = vmatpush1.msra.mxu0 %v73
    %661 = vmatprep.subr.mxu0 0.0
    %662 = vmatpush1.msra.mxu0 %v72
    %663 = vmatprep.subr.mxu0 0.0
    %664 = vmatpush1.msra.mxu0 %v71
    %665 = vmatprep.subr.mxu0 0.0
    %666 = vmatpush1.msra.mxu0 %v70
    %667 = vmatprep.subr.mxu0 0.0
    %668 = vmatpush2.msra.mxu0 0.0
    %669 = vmatprep.subr.mxu0 0.0
    %670 = vmatpush2.msra.mxu0 0.0
    %671 = vmatprep.subr.mxu0 0.0
    %672 = vmatpush2.msra.mxu0 0.0
    %673 = vmatprep.subr.mxu0 0.0
    %674 = vmatpush2.msra.mxu0 0.0
    %675 = vmatprep.subr.mxu0 0.0
    %676 = vmatpush2.msra.mxu0 0.0
    %677 = vmatprep.subr.mxu0 0.0
    %678 = vmatpush2.msra.mxu0 0.0
    %679 = vmatprep.subr.mxu0 0.0
    %680 = vmatpush2.msra.mxu0 0.0
    %681 = vmatprep.subr.mxu0 0.0
    %682 = vmatpush2.msra.mxu0 0.0
    %683 = vmatprep.subr.mxu0 0.0
    %684 = vmatpush2.msra.mxu0 0.0
    %685 = vmatprep.subr.mxu0 0.0
    %686 = vmatpush2.msra.mxu0 0.0
    %687 = vmatprep.subr.mxu0 0.0
    %688 = vmatpush2.msra.mxu0 0.0
    %689 = vmatprep.subr.mxu0 0.0
    %690 = vmatpush2.msra.mxu0 0.0
    %691 = vmatprep.subr.mxu0 0.0
    %692 = vmatpush2.msra.mxu0 0.0
    %693 = vmatprep.subr.mxu0 0.0
    %694 = vmatpush2.msra.mxu0 0.0
    %695 = vmatprep.subr.mxu0 0.0
    %696 = vmatpush2.msra.mxu0 0.0
    %697 = vmatprep.subr.mxu0 0.0
    %698 = vmatpush2.msra.mxu0 0.0
    %699 = vmatprep.mubr.f32.mxu0 0.0
    %700 = vmatmul.mubr.f32.gmra.mxu0 %v633
    %v701 = vpop.f32.mrf.mxu0
    %v702 = vadd.f32 0.0, %v701
    %v703 = vpop.f32.mrf.mxu0
    %704 = vdwg.mxu0
    %v705 = vadd.f32 %v632, %v702
    %v706 = vtanh.pop %v705
    %v707 = vmul.f32 %v706, %v66
    %v708 = vadd.f32 %v707, %v67
    %v709 = vmul.f32 %v708, %v618
    %711 = vrot.lane.b32.xlu0 %v708, 64
    %v712 = vpop.permute.xlu0 %711
    %v714 = vmul.f32 %v708, %v712
    %716 = vrot.lane.b32.xlu0 %v714, 32
    %v717 = vpop.permute.xlu0 %716
    %v719 = vadd.f32 %v709, %v717
    %v720 = vtanh.pop %v719
    %722 = vrot.lane.b32.xlu0 %v720, 64
    %v723 = vpop.permute.xlu0 %722
    %v725 = vmul.f32 %v708, %v723
    %727 = vrot.lane.b32.xlu0 %v725, 32
    %v728 = vpop.permute.xlu0 %727
    %s730 = scalar_lea.vmem [#allocation3], 32
    %731 = vst.msk [vmem:[%s730] sm:$0xff] %vm228, %v728
    %s732 = scalar_lea.vmem [#allocation2], 40
    %v733 = vld [vmem:[%s732] sm:$0xff]
    %v734 = vsel %vm228, %v728, 0
    %736 = vmatprep.subr.mxu0 0.0
    %737 = vmatpush1.msra.mxu0 0.0
    %738 = vmatprep.subr.mxu0 0.0
    %739 = vmatpush1.msra.mxu0 0.0
    %740 = vmatprep.subr.mxu0 0.0
    %741 = vmatpush1.msra.mxu0 0.0
    %742 = vmatprep.subr.mxu0 0.0
    %743 = vmatpush1.msra.mxu0 0.0
    %744 = vmatprep.subr.mxu0 0.0
    %745 = vmatpush1.msra.mxu0 0.0
    %746 = vmatprep.subr.mxu0 0.0
    %747 = vmatpush1.msra.mxu0 0.0
    %748 = vmatprep.subr.mxu0 0.0
    %749 = vmatpush1.msra.mxu0 0.0
    %750 = vmatprep.subr.mxu0 0.0
    %751 = vmatpush1.msra.mxu0 0.0
    %752 = vmatprep.subr.mxu0 0.0
    %753 = vmatpush1.msra.mxu0 0.0
    %754 = vmatprep.subr.mxu0 0.0
    %755 = vmatpush1.msra.mxu0 0.0
    %756 = vmatprep.subr.mxu0 0.0
    %757 = vmatpush1.msra.mxu0 0.0
    %758 = vmatprep.subr.mxu0 0.0
    %759 = vmatpush1.msra.mxu0 0.0
    %760 = vmatprep.subr.mxu0 0.0
    %761 = vmatpush1.msra.mxu0 %v73
    %762 = vmatprep.subr.mxu0 0.0
    %763 = vmatpush1.msra.mxu0 %v72
    %764 = vmatprep.subr.mxu0 0.0
    %765 = vmatpush1.msra.mxu0 %v71
    %766 = vmatprep.subr.mxu0 0.0
    %767 = vmatpush1.msra.mxu0 %v70
    %768 = vmatprep.subr.mxu0 0.0
    %769 = vmatpush2.msra.mxu0 0.0
    %770 = vmatprep.subr.mxu0 0.0
    %771 = vmatpush2.msra.mxu0 0.0
    %772 = vmatprep.subr.mxu0 0.0
    %773 = vmatpush2.msra.mxu0 0.0
    %774 = vmatprep.subr.mxu0 0.0
    %775 = vmatpush2.msra.mxu0 0.0
    %776 = vmatprep.subr.mxu0 0.0
    %777 = vmatpush2.msra.mxu0 0.0
    %778 = vmatprep.subr.mxu0 0.0
    %779 = vmatpush2.msra.mxu0 0.0
    %780 = vmatprep.subr.mxu0 0.0
    %781 = vmatpush2.msra.mxu0 0.0
    %782 = vmatprep.subr.mxu0 0.0
    %783 = vmatpush2.msra.mxu0 0.0
    %784 = vmatprep.subr.mxu0 0.0
    %785 = vmatpush2.msra.mxu0 0.0
    %786 = vmatprep.subr.mxu0 0.0
    %787 = vmatpush2.msra.mxu0 0.0
    %788 = vmatprep.subr.mxu0 0.0
    %789 = vmatpush2.msra.mxu0 0.0
    %790 = vmatprep.subr.mxu0 0.0
    %791 = vmatpush2.msra.mxu0 0.0
    %792 = vmatprep.subr.mxu0 0.0
    %793 = vmatpush2.msra.mxu0 0.0
    %794 = vmatprep.subr.mxu0 0.0
    %795 = vmatpush2.msra.mxu0 0.0
    %796 = vmatprep.subr.mxu0 0.0
    %797 = vmatpush2.msra.mxu0 0.0
    %798 = vmatprep.subr.mxu0 0.0
    %799 = vmatpush2.msra.mxu0 0.0
    %800 = vmatprep.mubr.f32.mxu0 0.0
    %801 = vmatmul.mubr.f32.gmra.mxu0 %v734
    %v802 = vpop.f32.mrf.mxu0
    %v803 = vadd.f32 0.0, %v802
    %v804 = vpop.f32.mrf.mxu0
    %805 = vdwg.mxu0
    %v806 = vadd.f32 %v733, %v803
    %v807 = vtanh.pop %v806
    %v808 = vmul.f32 %v807, %v66
    %v809 = vadd.f32 %v808, %v67
    %v810 = vmul.f32 %v809, %v719
    %812 = vrot.lane.b32.xlu0 %v809, 64
    %v813 = vpop.permute.xlu0 %812
    %v815 = vmul.f32 %v809, %v813
    %817 = vrot.lane.b32.xlu0 %v815, 32
    %v818 = vpop.permute.xlu0 %817
    %v820 = vadd.f32 %v810, %v818
    %v821 = vtanh.pop %v820
    %823 = vrot.lane.b32.xlu0 %v821, 64
    %v824 = vpop.permute.xlu0 %823
    %v826 = vmul.f32 %v809, %v824
    %828 = vrot.lane.b32.xlu0 %v826, 32
    %v829 = vpop.permute.xlu0 %828
    %s831 = scalar_lea.vmem [#allocation3], 40
    %832 = vst.msk [vmem:[%s831] sm:$0xff] %vm228, %v829
    %s833 = scalar_lea.vmem [#allocation2], 48
    %v834 = vld [vmem:[%s833] sm:$0xff]
    %v835 = vsel %vm228, %v829, 0
    %837 = vmatprep.subr.mxu0 0.0
    %838 = vmatpush1.msra.mxu0 0.0
    %839 = vmatprep.subr.mxu0 0.0
    %840 = vmatpush1.msra.mxu0 0.0
    %841 = vmatprep.subr.mxu0 0.0
    %842 = vmatpush1.msra.mxu0 0.0
    %843 = vmatprep.subr.mxu0 0.0
    %844 = vmatpush1.msra.mxu0 0.0
    %845 = vmatprep.subr.mxu0 0.0
    %846 = vmatpush1.msra.mxu0 0.0
    %847 = vmatprep.subr.mxu0 0.0
    %848 = vmatpush1.msra.mxu0 0.0
    %849 = vmatprep.subr.mxu0 0.0
    %850 = vmatpush1.msra.mxu0 0.0
    %851 = vmatprep.subr.mxu0 0.0
    %852 = vmatpush1.msra.mxu0 0.0
    %853 = vmatprep.subr.mxu0 0.0
    %854 = vmatpush1.msra.mxu0 0.0
    %855 = vmatprep.subr.mxu0 0.0
    %856 = vmatpush1.msra.mxu0 0.0
    %857 = vmatprep.subr.mxu0 0.0
    %858 = vmatpush1.msra.mxu0 0.0
    %859 = vmatprep.subr.mxu0 0.0
    %860 = vmatpush1.msra.mxu0 0.0
    %861 = vmatprep.subr.mxu0 0.0
    %862 = vmatpush1.msra.mxu0 %v73
    %863 = vmatprep.subr.mxu0 0.0
    %864 = vmatpush1.msra.mxu0 %v72
    %865 = vmatprep.subr.mxu0 0.0
    %866 = vmatpush1.msra.mxu0 %v71
    %867 = vmatprep.subr.mxu0 0.0
    %868 = vmatpush1.msra.mxu0 %v70
    %869 = vmatprep.subr.mxu0 0.0
    %870 = vmatpush2.msra.mxu0 0.0
    %871 = vmatprep.subr.mxu0 0.0
    %872 = vmatpush2.msra.mxu0 0.0
    %873 = vmatprep.subr.mxu0 0.0
    %874 = vmatpush2.msra.mxu0 0.0
    %875 = vmatprep.subr.mxu0 0.0
    %876 = vmatpush2.msra.mxu0 0.0
    %877 = vmatprep.subr.mxu0 0.0
    %878 = vmatpush2.msra.mxu0 0.0
    %879 = vmatprep.subr.mxu0 0.0
    %880 = vmatpush2.msra.mxu0 0.0
    %881 = vmatprep.subr.mxu0 0.0
    %882 = vmatpush2.msra.mxu0 0.0
    %883 = vmatprep.subr.mxu0 0.0
    %884 = vmatpush2.msra.mxu0 0.0
    %885 = vmatprep.subr.mxu0 0.0
    %886 = vmatpush2.msra.mxu0 0.0
    %887 = vmatprep.subr.mxu0 0.0
    %888 = vmatpush2.msra.mxu0 0.0
    %889 = vmatprep.subr.mxu0 0.0
    %890 = vmatpush2.msra.mxu0 0.0
    %891 = vmatprep.subr.mxu0 0.0
    %892 = vmatpush2.msra.mxu0 0.0
    %893 = vmatprep.subr.mxu0 0.0
    %894 = vmatpush2.msra.mxu0 0.0
    %895 = vmatprep.subr.mxu0 0.0
    %896 = vmatpush2.msra.mxu0 0.0
    %897 = vmatprep.subr.mxu0 0.0
    %898 = vmatpush2.msra.mxu0 0.0
    %899 = vmatprep.subr.mxu0 0.0
    %900 = vmatpush2.msra.mxu0 0.0
    %901 = vmatprep.mubr.f32.mxu0 0.0
    %902 = vmatmul.mubr.f32.gmra.mxu0 %v835
    %v903 = vpop.f32.mrf.mxu0
    %v904 = vadd.f32 0.0, %v903
    %v905 = vpop.f32.mrf.mxu0
    %906 = vdwg.mxu0
    %v907 = vadd.f32 %v834, %v904
    %v908 = vtanh.pop %v907
    %v909 = vmul.f32 %v908, %v66
    %v910 = vadd.f32 %v909, %v67
    %v911 = vmul.f32 %v910, %v820
    %913 = vrot.lane.b32.xlu0 %v910, 64
    %v914 = vpop.permute.xlu0 %913
    %v916 = vmul.f32 %v910, %v914
    %918 = vrot.lane.b32.xlu0 %v916, 32
    %v919 = vpop.permute.xlu0 %918
    %v921 = vadd.f32 %v911, %v919
    %v922 = vtanh.pop %v921
    %924 = vrot.lane.b32.xlu0 %v922, 64
    %v925 = vpop.permute.xlu0 %924
    %v927 = vmul.f32 %v910, %v925
    %929 = vrot.lane.b32.xlu0 %v927, 32
    %v930 = vpop.permute.xlu0 %929
    %s932 = scalar_lea.vmem [#allocation3], 48
    %933 = vst.msk [vmem:[%s932] sm:$0xff] %vm228, %v930
    %s934 = scalar_lea.vmem [#allocation2], 56
    %v935 = vld [vmem:[%s934] sm:$0xff]
    %v936 = vsel %vm228, %v930, 0
    %938 = vmatprep.subr.mxu0 0.0
    %939 = vmatpush1.msra.mxu0 0.0
    %940 = vmatprep.subr.mxu0 0.0
    %941 = vmatpush1.msra.mxu0 0.0
    %942 = vmatprep.subr.mxu0 0.0
    %943 = vmatpush1.msra.mxu0 0.0
    %944 = vmatprep.subr.mxu0 0.0
    %945 = vmatpush1.msra.mxu0 0.0
    %946 = vmatprep.subr.mxu0 0.0
    %947 = vmatpush1.msra.mxu0 0.0
    %948 = vmatprep.subr.mxu0 0.0
    %949 = vmatpush1.msra.mxu0 0.0
    %950 = vmatprep.subr.mxu0 0.0
    %951 = vmatpush1.msra.mxu0 0.0
    %952 = vmatprep.subr.mxu0 0.0
    %953 = vmatpush1.msra.mxu0 0.0
    %954 = vmatprep.subr.mxu0 0.0
    %955 = vmatpush1.msra.mxu0 0.0
    %956 = vmatprep.subr.mxu0 0.0
    %957 = vmatpush1.msra.mxu0 0.0
    %958 = vmatprep.subr.mxu0 0.0
    %959 = vmatpush1.msra.mxu0 0.0
    %960 = vmatprep.subr.mxu0 0.0
    %961 = vmatpush1.msra.mxu0 0.0
    %962 = vmatprep.subr.mxu0 0.0
    %963 = vmatpush1.msra.mxu0 %v73
    %964 = vmatprep.subr.mxu0 0.0
    %965 = vmatpush1.msra.mxu0 %v72
    %966 = vmatprep.subr.mxu0 0.0
    %967 = vmatpush1.msra.mxu0 %v71
    %968 = vmatprep.subr.mxu0 0.0
    %969 = vmatpush1.msra.mxu0 %v70
    %970 = vmatprep.subr.mxu0 0.0
    %971 = vmatpush2.msra.mxu0 0.0
    %972 = vmatprep.subr.mxu0 0.0
    %973 = vmatpush2.msra.mxu0 0.0
    %974 = vmatprep.subr.mxu0 0.0
    %975 = vmatpush2.msra.mxu0 0.0
    %976 = vmatprep.subr.mxu0 0.0
    %977 = vmatpush2.msra.mxu0 0.0
    %978 = vmatprep.subr.mxu0 0.0
    %979 = vmatpush2.msra.mxu0 0.0
    %980 = vmatprep.subr.mxu0 0.0
    %981 = vmatpush2.msra.mxu0 0.0
    %982 = vmatprep.subr.mxu0 0.0
    %983 = vmatpush2.msra.mxu0 0.0
    %984 = vmatprep.subr.mxu0 0.0
    %985 = vmatpush2.msra.mxu0 0.0
    %986 = vmatprep.subr.mxu0 0.0
    %987 = vmatpush2.msra.mxu0 0.0
    %988 = vmatprep.subr.mxu0 0.0
    %989 = vmatpush2.msra.mxu0 0.0
    %990 = vmatprep.subr.mxu0 0.0
    %991 = vmatpush2.msra.mxu0 0.0
    %992 = vmatprep.subr.mxu0 0.0
    %993 = vmatpush2.msra.mxu0 0.0
    %994 = vmatprep.subr.mxu0 0.0
    %995 = vmatpush2.msra.mxu0 0.0
    %996 = vmatprep.subr.mxu0 0.0
    %997 = vmatpush2.msra.mxu0 0.0
    %998 = vmatprep.subr.mxu0 0.0
    %999 = vmatpush2.msra.mxu0 0.0
    %1000 = vmatprep.subr.mxu0 0.0
    %1001 = vmatpush2.msra.mxu0 0.0
    %1002 = vmatprep.mubr.f32.mxu0 0.0
    %1003 = vmatmul.mubr.f32.gmra.mxu0 %v936
    %v1004 = vpop.f32.mrf.mxu0
    %v1005 = vadd.f32 0.0, %v1004
    %v1006 = vpop.f32.mrf.mxu0
    %1007 = vdwg.mxu0
    %v1008 = vadd.f32 %v935, %v1005
    %v1009 = vtanh.pop %v1008
    %v1010 = vmul.f32 %v1009, %v66
    %v1011 = vadd.f32 %v1010, %v67
    %v1012 = vmul.f32 %v1011, %v921
    %1014 = vrot.lane.b32.xlu0 %v1011, 64
    %v1015 = vpop.permute.xlu0 %1014
    %v1017 = vmul.f32 %v1011, %v1015
    %1019 = vrot.lane.b32.xlu0 %v1017, 32
    %v1020 = vpop.permute.xlu0 %1019
    %v1022 = vadd.f32 %v1012, %v1020
    %v1023 = vtanh.pop %v1022
    %1025 = vrot.lane.b32.xlu0 %v1023, 64
    %v1026 = vpop.permute.xlu0 %1025
    %v1028 = vmul.f32 %v1011, %v1026
    %1030 = vrot.lane.b32.xlu0 %v1028, 32
    %v1031 = vpop.permute.xlu0 %1030
    %s1033 = scalar_lea.vmem [#allocation3], 56
    %1034 = vst.msk [vmem:[%s1033] sm:$0xff] %vm228, %v1031
    %v1035 = vld [vmem:[%s4] sm:$0xff]
    %v1036 = vld [vmem:[%s4 + $0x8] sm:$0xff]
    %v1037 = vld [vmem:[%s4 + $0x10] sm:$0xff]
    %v1038 = vld [vmem:[%s4 + $0x18] sm:$0xff]
    %v1039 = vld [vmem:[#allocation4] sm:$0xff]
    %v1040 = vld [vmem:[#allocation4 + $0x8] sm:$0xff]
    %v1041 = vld [vmem:[#allocation4 + $0x10] sm:$0xff]
    %v1042 = vld [vmem:[#allocation4 + $0x18] sm:$0xff]
    %v1043 = vld [vmem:[%s6] sm:$0x1]
    %v1044 = vld [vmem:[#allocation3] sm:$0xff]
    %v1045 = vld [vmem:[#allocation3 + $0x8] sm:$0xff]
    %v1046 = vld [vmem:[#allocation3 + $0x10] sm:$0xff]
    %v1047 = vld [vmem:[#allocation3 + $0x18] sm:$0xff]
    %v1048 = vld [vmem:[#allocation3 + $0x20] sm:$0xff]
    %v1049 = vld [vmem:[#allocation3 + $0x28] sm:$0xff]
    %v1050 = vld [vmem:[#allocation3 + $0x30] sm:$0xff]
    %v1051 = vld [vmem:[#allocation3 + $0x38] sm:$0xff]
    %v1053 = vlaneseq
    %v1054 = vshrl.u32 %v1053, 7
    %v1055 = vsub.s32 0, %v1054
    %v1056 = vrot.slane %v1043, %v1055
    %v1059 = vsel %vm228, %v1044, 0
    %v1062 = vsel %vm228, %v1045, 0
    %v1065 = vsel %vm228, %v1046, 0
    %v1068 = vsel %vm228, %v1047, 0
    %v1071 = vsel %vm228, %v1048, 0
    %v1074 = vsel %vm228, %v1049, 0
    %v1077 = vsel %vm228, %v1050, 0
    %v1080 = vsel %vm228, %v1051, 0
    %1082 = vmatprep.subr.mxu0 0.0
    %1083 = vmatpush1.msra.mxu0 0.0
    %1084 = vmatprep.subr.mxu0 0.0
    %1085 = vmatpush1.msra.mxu0 0.0
    %1086 = vmatprep.subr.mxu0 0.0
    %1087 = vmatpush1.msra.mxu0 0.0
    %1088 = vmatprep.subr.mxu0 0.0
    %1089 = vmatpush1.msra.mxu0 0.0
    %1090 = vmatprep.subr.mxu0 0.0
    %1091 = vmatpush1.msra.mxu0 0.0
    %1092 = vmatprep.subr.mxu0 0.0
    %1093 = vmatpush1.msra.mxu0 0.0
    %1094 = vmatprep.subr.mxu0 0.0
    %1095 = vmatpush1.msra.mxu0 0.0
    %1096 = vmatprep.subr.mxu0 0.0
    %1097 = vmatpush1.msra.mxu0 0.0
    %1098 = vmatprep.subr.mxu0 0.0
    %1099 = vmatpush1.msra.mxu0 0.0
    %1100 = vmatprep.subr.mxu0 0.0
    %1101 = vmatpush1.msra.mxu0 0.0
    %1102 = vmatprep.subr.mxu0 0.0
    %1103 = vmatpush1.msra.mxu0 0.0
    %1104 = vmatprep.subr.mxu0 0.0
    %1105 = vmatpush1.msra.mxu0 0.0
    %1106 = vmatprep.subr.mxu0 0.0
    %1107 = vmatpush1.msra.mxu0 %v1038
    %1108 = vmatprep.subr.mxu0 0.0
    %1109 = vmatpush1.msra.mxu0 %v1037
    %1110 = vmatprep.subr.mxu0 0.0
    %1111 = vmatpush1.msra.mxu0 %v1036
    %1112 = vmatprep.subr.mxu0 0.0
    %1113 = vmatpush1.msra.mxu0 %v1035
    %1114 = vmatprep.subr.mxu0 0.0
    %1115 = vmatpush2.msra.mxu0 0.0
    %1116 = vmatprep.subr.mxu0 0.0
    %1117 = vmatpush2.msra.mxu0 0.0
    %1118 = vmatprep.subr.mxu0 0.0
    %1119 = vmatpush2.msra.mxu0 0.0
    %1120 = vmatprep.subr.mxu0 0.0
    %1121 = vmatpush2.msra.mxu0 0.0
    %1122 = vmatprep.subr.mxu0 0.0
    %1123 = vmatpush2.msra.mxu0 0.0
    %1124 = vmatprep.subr.mxu0 0.0
    %1125 = vmatpush2.msra.mxu0 0.0
    %1126 = vmatprep.subr.mxu0 0.0
    %1127 = vmatpush2.msra.mxu0 0.0
    %1128 = vmatprep.subr.mxu0 0.0
    %1129 = vmatpush2.msra.mxu0 0.0
    %1130 = vmatprep.subr.mxu0 0.0
    %1131 = vmatpush2.msra.mxu0 0.0
    %1132 = vmatprep.subr.mxu0 0.0
    %1133 = vmatpush2.msra.mxu0 0.0
    %1134 = vmatprep.subr.mxu0 0.0
    %1135 = vmatpush2.msra.mxu0 0.0
    %1136 = vmatprep.subr.mxu0 0.0
    %1137 = vmatpush2.msra.mxu0 0.0
    %1138 = vmatprep.subr.mxu0 0.0
    %1139 = vmatpush2.msra.mxu0 0.0
    %1140 = vmatprep.subr.mxu0 0.0
    %1141 = vmatpush2.msra.mxu0 0.0
    %1142 = vmatprep.subr.mxu0 0.0
    %1143 = vmatpush2.msra.mxu0 0.0
    %1144 = vmatprep.subr.mxu0 0.0
    %1145 = vmatpush2.msra.mxu0 0.0
    %1146 = vmatprep.mubr.f32.mxu0 0.0
    %1147 = vmatmul.mubr.f32.gmra.mxu0 %v1059
    %v1148 = vpop.f32.mrf.mxu0
    %v1149 = vadd.f32 %v1056, %v1148
    %v1150 = vpop.f32.mrf.mxu0
    %1151 = vmatprep.mubr.f32.mxu0 0.0
    %1152 = vmatmul.mubr.f32.gmra.mxu0 %v1062
    %v1153 = vpop.f32.mrf.mxu0
    %v1154 = vadd.f32 %v1056, %v1153
    %v1155 = vpop.f32.mrf.mxu0
    %1156 = vmatprep.mubr.f32.mxu0 0.0
    %1157 = vmatmul.mubr.f32.gmra.mxu0 %v1065
    %v1158 = vpop.f32.mrf.mxu0
    %v1159 = vadd.f32 %v1056, %v1158
    %v1160 = vpop.f32.mrf.mxu0
    %1161 = vmatprep.mubr.f32.mxu0 0.0
    %1162 = vmatmul.mubr.f32.gmra.mxu0 %v1068
    %v1163 = vpop.f32.mrf.mxu0
    %v1164 = vadd.f32 %v1056, %v1163
    %v1165 = vpop.f32.mrf.mxu0
    %1166 = vmatprep.mubr.f32.mxu0 0.0
    %1167 = vmatmul.mubr.f32.gmra.mxu0 %v1071
    %v1168 = vpop.f32.mrf.mxu0
    %v1169 = vadd.f32 %v1056, %v1168
    %v1170 = vpop.f32.mrf.mxu0
    %1171 = vmatprep.mubr.f32.mxu0 0.0
    %1172 = vmatmul.mubr.f32.gmra.mxu0 %v1074
    %v1173 = vpop.f32.mrf.mxu0
    %v1174 = vadd.f32 %v1056, %v1173
    %v1175 = vpop.f32.mrf.mxu0
    %1176 = vmatprep.mubr.f32.mxu0 0.0
    %1177 = vmatmul.mubr.f32.gmra.mxu0 %v1077
    %v1178 = vpop.f32.mrf.mxu0
    %v1179 = vadd.f32 %v1056, %v1178
    %v1180 = vpop.f32.mrf.mxu0
    %1181 = vmatprep.mubr.f32.mxu0 0.0
    %1182 = vmatmul.mubr.f32.gmra.mxu0 %v1080
    %v1183 = vpop.f32.mrf.mxu0
    %v1184 = vadd.f32 %v1056, %v1183
    %v1185 = vpop.f32.mrf.mxu0
    %1186 = vdwg.mxu0
    %1187 = vst [vmem:[#allocation2] sm:$0xff] %v1149
    %1188 = vst [vmem:[#allocation2 + $0x8] sm:$0xff] %v1154
    %1189 = vst [vmem:[#allocation2 + $0x10] sm:$0xff] %v1159
    %1190 = vst [vmem:[#allocation2 + $0x18] sm:$0xff] %v1164
    %1191 = vst [vmem:[#allocation2 + $0x20] sm:$0xff] %v1169
    %1192 = vst [vmem:[#allocation2 + $0x28] sm:$0xff] %v1174
    %1193 = vst [vmem:[#allocation2 + $0x30] sm:$0xff] %v1179
    %1194 = vst [vmem:[#allocation2 + $0x38] sm:$0xff] %v1184
    %v1195 = vld [vmem:[#allocation2] sm:$0xff]
    %1196 = vmatprep.subr.mxu0 0.0
    %1197 = vmatpush1.msra.mxu0 0.0
    %1198 = vmatprep.subr.mxu0 0.0
    %1199 = vmatpush1.msra.mxu0 0.0
    %1200 = vmatprep.subr.mxu0 0.0
    %1201 = vmatpush1.msra.mxu0 0.0
    %1202 = vmatprep.subr.mxu0 0.0
    %1203 = vmatpush1.msra.mxu0 0.0
    %1204 = vmatprep.subr.mxu0 0.0
    %1205 = vmatpush1.msra.mxu0 0.0
    %1206 = vmatprep.subr.mxu0 0.0
    %1207 = vmatpush1.msra.mxu0 0.0
    %1208 = vmatprep.subr.mxu0 0.0
    %1209 = vmatpush1.msra.mxu0 0.0
    %1210 = vmatprep.subr.mxu0 0.0
    %1211 = vmatpush1.msra.mxu0 0.0
    %1212 = vmatprep.subr.mxu0 0.0
    %1213 = vmatpush1.msra.mxu0 0.0
    %1214 = vmatprep.subr.mxu0 0.0
    %1215 = vmatpush1.msra.mxu0 0.0
    %1216 = vmatprep.subr.mxu0 0.0
    %1217 = vmatpush1.msra.mxu0 0.0
    %1218 = vmatprep.subr.mxu0 0.0
    %1219 = vmatpush1.msra.mxu0 0.0
    %1220 = vmatprep.subr.mxu0 0.0
    %1221 = vmatpush1.msra.mxu0 %v1042
    %1222 = vmatprep.subr.mxu0 0.0
    %1223 = vmatpush1.msra.mxu0 %v1041
    %1224 = vmatprep.subr.mxu0 0.0
    %1225 = vmatpush1.msra.mxu0 %v1040
    %1226 = vmatprep.subr.mxu0 0.0
    %1227 = vmatpush1.msra.mxu0 %v1039
    %1228 = vmatprep.subr.mxu0 0.0
    %1229 = vmatpush2.msra.mxu0 0.0
    %1230 = vmatprep.subr.mxu0 0.0
    %1231 = vmatpush2.msra.mxu0 0.0
    %1232 = vmatprep.subr.mxu0 0.0
    %1233 = vmatpush2.msra.mxu0 0.0
    %1234 = vmatprep.subr.mxu0 0.0
    %1235 = vmatpush2.msra.mxu0 0.0
    %1236 = vmatprep.subr.mxu0 0.0
    %1237 = vmatpush2.msra.mxu0 0.0
    %1238 = vmatprep.subr.mxu0 0.0
    %1239 = vmatpush2.msra.mxu0 0.0
    %1240 = vmatprep.subr.mxu0 0.0
    %1241 = vmatpush2.msra.mxu0 0.0
    %1242 = vmatprep.subr.mxu0 0.0
    %1243 = vmatpush2.msra.mxu0 0.0
    %1244 = vmatprep.subr.mxu0 0.0
    %1245 = vmatpush2.msra.mxu0 0.0
    %1246 = vmatprep.subr.mxu0 0.0
    %1247 = vmatpush2.msra.mxu0 0.0
    %1248 = vmatprep.subr.mxu0 0.0
    %1249 = vmatpush2.msra.mxu0 0.0
    %1250 = vmatprep.subr.mxu0 0.0
    %1251 = vmatpush2.msra.mxu0 0.0
    %1252 = vmatprep.subr.mxu0 0.0
    %1253 = vmatpush2.msra.mxu0 0.0
    %1254 = vmatprep.subr.mxu0 0.0
    %1255 = vmatpush2.msra.mxu0 0.0
    %1256 = vmatprep.subr.mxu0 0.0
    %1257 = vmatpush2.msra.mxu0 0.0
    %1258 = vmatprep.subr.mxu0 0.0
    %1259 = vmatpush2.msra.mxu0 0.0
    %1260 = vmatprep.mubr.f32.mxu0 0.0
    %1261 = vmatmul.mubr.f32.gmra.mxu0 %v230
    %v1262 = vpop.f32.mrf.mxu0
    %v1263 = vadd.f32 0.0, %v1262
    %v1264 = vpop.f32.mrf.mxu0
    %1265 = vdwg.mxu0
    %v1266 = vadd.f32 %v1195, %v1263
    %v1267 = vtanh.pop %v1266
    %v1268 = vmul.f32 %v1267, %v66
    %v1269 = vadd.f32 %v1268, %v67
    %v1270 = vmul.f32 %v1269, 0.0
    %1272 = vrot.lane.b32.xlu0 %v1269, 64
    %v1273 = vpop.permute.xlu0 %1272
    %v1275 = vmul.f32 %v1269, %v1273
    %1277 = vrot.lane.b32.xlu0 %v1275, 32
    %v1278 = vpop.permute.xlu0 %1277
    %v1280 = vadd.f32 %v1270, %v1278
    %v1281 = vtanh.pop %v1280
    %1283 = vrot.lane.b32.xlu0 %v1281, 64
    %v1284 = vpop.permute.xlu0 %1283
    %v1286 = vmul.f32 %v1269, %v1284
    %v1287 = vld [vmem:[%s328] sm:$0xff]
    %1289 = vrot.lane.b32.xlu0 %v1286, 32
    %v1290 = vpop.permute.xlu0 %1289
    %v1291 = vsel %vm228, %v1290, 0
    %1293 = vmatprep.subr.mxu0 0.0
    %1294 = vmatpush1.msra.mxu0 0.0
    %1295 = vmatprep.subr.mxu0 0.0
    %1296 = vmatpush1.msra.mxu0 0.0
    %1297 = vmatprep.subr.mxu0 0.0
    %1298 = vmatpush1.msra.mxu0 0.0
    %1299 = vmatprep.subr.mxu0 0.0
    %1300 = vmatpush1.msra.mxu0 0.0
    %1301 = vmatprep.subr.mxu0 0.0
    %1302 = vmatpush1.msra.mxu0 0.0
    %1303 = vmatprep.subr.mxu0 0.0
    %1304 = vmatpush1.msra.mxu0 0.0
    %1305 = vmatprep.subr.mxu0 0.0
    %1306 = vmatpush1.msra.mxu0 0.0
    %1307 = vmatprep.subr.mxu0 0.0
    %1308 = vmatpush1.msra.mxu0 0.0
    %1309 = vmatprep.subr.mxu0 0.0
    %1310 = vmatpush1.msra.mxu0 0.0
    %1311 = vmatprep.subr.mxu0 0.0
    %1312 = vmatpush1.msra.mxu0 0.0
    %1313 = vmatprep.subr.mxu0 0.0
    %1314 = vmatpush1.msra.mxu0 0.0
    %1315 = vmatprep.subr.mxu0 0.0
    %1316 = vmatpush1.msra.mxu0 0.0
    %1317 = vmatprep.subr.mxu0 0.0
    %1318 = vmatpush1.msra.mxu0 %v1042
    %1319 = vmatprep.subr.mxu0 0.0
    %1320 = vmatpush1.msra.mxu0 %v1041
    %1321 = vmatprep.subr.mxu0 0.0
    %1322 = vmatpush1.msra.mxu0 %v1040
    %1323 = vmatprep.subr.mxu0 0.0
    %1324 = vmatpush1.msra.mxu0 %v1039
    %1325 = vmatprep.subr.mxu0 0.0
    %1326 = vmatpush2.msra.mxu0 0.0
    %1327 = vmatprep.subr.mxu0 0.0
    %1328 = vmatpush2.msra.mxu0 0.0
    %1329 = vmatprep.subr.mxu0 0.0
    %1330 = vmatpush2.msra.mxu0 0.0
    %1331 = vmatprep.subr.mxu0 0.0
    %1332 = vmatpush2.msra.mxu0 0.0
    %1333 = vmatprep.subr.mxu0 0.0
    %1334 = vmatpush2.msra.mxu0 0.0
    %1335 = vmatprep.subr.mxu0 0.0
    %1336 = vmatpush2.msra.mxu0 0.0
    %1337 = vmatprep.subr.mxu0 0.0
    %1338 = vmatpush2.msra.mxu0 0.0
    %1339 = vmatprep.subr.mxu0 0.0
    %1340 = vmatpush2.msra.mxu0 0.0
    %1341 = vmatprep.subr.mxu0 0.0
    %1342 = vmatpush2.msra.mxu0 0.0
    %1343 = vmatprep.subr.mxu0 0.0
    %1344 = vmatpush2.msra.mxu0 0.0
    %1345 = vmatprep.subr.mxu0 0.0
    %1346 = vmatpush2.msra.mxu0 0.0
    %1347 = vmatprep.subr.mxu0 0.0
    %1348 = vmatpush2.msra.mxu0 0.0
    %1349 = vmatprep.subr.mxu0 0.0
    %1350 = vmatpush2.msra.mxu0 0.0
    %1351 = vmatprep.subr.mxu0 0.0
    %1352 = vmatpush2.msra.mxu0 0.0
    %1353 = vmatprep.subr.mxu0 0.0
    %1354 = vmatpush2.msra.mxu0 0.0
    %1355 = vmatprep.subr.mxu0 0.0
    %1356 = vmatpush2.msra.mxu0 0.0
    %1357 = vmatprep.mubr.f32.mxu0 0.0
    %1358 = vmatmul.mubr.f32.gmra.mxu0 %v1291
    %v1359 = vpop.f32.mrf.mxu0
    %v1360 = vadd.f32 0.0, %v1359
    %v1361 = vpop.f32.mrf.mxu0
    %1362 = vdwg.mxu0
    %v1363 = vadd.f32 %v1287, %v1360
    %v1364 = vtanh.pop %v1363
    %v1365 = vmul.f32 %v1364, %v66
    %v1366 = vadd.f32 %v1365, %v67
    %v1367 = vmul.f32 %v1366, %v1280
    %1369 = vrot.lane.b32.xlu0 %v1366, 64
    %v1370 = vpop.permute.xlu0 %1369
    %v1372 = vmul.f32 %v1366, %v1370
    %1374 = vrot.lane.b32.xlu0 %v1372, 32
    %v1375 = vpop.permute.xlu0 %1374
    %v1377 = vadd.f32 %v1367, %v1375
    %v1378 = vtanh.pop %v1377
    %1380 = vrot.lane.b32.xlu0 %v1378, 64
    %v1381 = vpop.permute.xlu0 %1380
    %v1383 = vmul.f32 %v1366, %v1381
    %v1384 = vld [vmem:[%s429] sm:$0xff]
    %1386 = vrot.lane.b32.xlu0 %v1383, 32
    %v1387 = vpop.permute.xlu0 %1386
    %v1388 = vsel %vm228, %v1387, 0
    %1390 = vmatprep.subr.mxu0 0.0
    %1391 = vmatpush1.msra.mxu0 0.0
    %1392 = vmatprep.subr.mxu0 0.0
    %1393 = vmatpush1.msra.mxu0 0.0
    %1394 = vmatprep.subr.mxu0 0.0
    %1395 = vmatpush1.msra.mxu0 0.0
    %1396 = vmatprep.subr.mxu0 0.0
    %1397 = vmatpush1.msra.mxu0 0.0
    %1398 = vmatprep.subr.mxu0 0.0
    %1399 = vmatpush1.msra.mxu0 0.0
    %1400 = vmatprep.subr.mxu0 0.0
    %1401 = vmatpush1.msra.mxu0 0.0
    %1402 = vmatprep.subr.mxu0 0.0
    %1403 = vmatpush1.msra.mxu0 0.0
    %1404 = vmatprep.subr.mxu0 0.0
    %1405 = vmatpush1.msra.mxu0 0.0
    %1406 = vmatprep.subr.mxu0 0.0
    %1407 = vmatpush1.msra.mxu0 0.0
    %1408 = vmatprep.subr.mxu0 0.0
    %1409 = vmatpush1.msra.mxu0 0.0
    %1410 = vmatprep.subr.mxu0 0.0
    %1411 = vmatpush1.msra.mxu0 0.0
    %1412 = vmatprep.subr.mxu0 0.0
    %1413 = vmatpush1.msra.mxu0 0.0
    %1414 = vmatprep.subr.mxu0 0.0
    %1415 = vmatpush1.msra.mxu0 %v1042
    %1416 = vmatprep.subr.mxu0 0.0
    %1417 = vmatpush1.msra.mxu0 %v1041
    %1418 = vmatprep.subr.mxu0 0.0
    %1419 = vmatpush1.msra.mxu0 %v1040
    %1420 = vmatprep.subr.mxu0 0.0
    %1421 = vmatpush1.msra.mxu0 %v1039
    %1422 = vmatprep.subr.mxu0 0.0
    %1423 = vmatpush2.msra.mxu0 0.0
    %1424 = vmatprep.subr.mxu0 0.0
    %1425 = vmatpush2.msra.mxu0 0.0
    %1426 = vmatprep.subr.mxu0 0.0
    %1427 = vmatpush2.msra.mxu0 0.0
    %1428 = vmatprep.subr.mxu0 0.0
    %1429 = vmatpush2.msra.mxu0 0.0
    %1430 = vmatprep.subr.mxu0 0.0
    %1431 = vmatpush2.msra.mxu0 0.0
    %1432 = vmatprep.subr.mxu0 0.0
    %1433 = vmatpush2.msra.mxu0 0.0
    %1434 = vmatprep.subr.mxu0 0.0
    %1435 = vmatpush2.msra.mxu0 0.0
    %1436 = vmatprep.subr.mxu0 0.0
    %1437 = vmatpush2.msra.mxu0 0.0
    %1438 = vmatprep.subr.mxu0 0.0
    %1439 = vmatpush2.msra.mxu0 0.0
    %1440 = vmatprep.subr.mxu0 0.0
    %1441 = vmatpush2.msra.mxu0 0.0
    %1442 = vmatprep.subr.mxu0 0.0
    %1443 = vmatpush2.msra.mxu0 0.0
    %1444 = vmatprep.subr.mxu0 0.0
    %1445 = vmatpush2.msra.mxu0 0.0
    %1446 = vmatprep.subr.mxu0 0.0
    %1447 = vmatpush2.msra.mxu0 0.0
    %1448 = vmatprep.subr.mxu0 0.0
    %1449 = vmatpush2.msra.mxu0 0.0
    %1450 = vmatprep.subr.mxu0 0.0
    %1451 = vmatpush2.msra.mxu0 0.0
    %1452 = vmatprep.subr.mxu0 0.0
    %1453 = vmatpush2.msra.mxu0 0.0
    %1454 = vmatprep.mubr.f32.mxu0 0.0
    %1455 = vmatmul.mubr.f32.gmra.mxu0 %v1388
    %v1456 = vpop.f32.mrf.mxu0
    %v1457 = vadd.f32 0.0, %v1456
    %v1458 = vpop.f32.mrf.mxu0
    %1459 = vdwg.mxu0
    %v1460 = vadd.f32 %v1384, %v1457
    %v1461 = vtanh.pop %v1460
    %v1462 = vmul.f32 %v1461, %v66
    %v1463 = vadd.f32 %v1462, %v67
    %v1464 = vmul.f32 %v1463, %v1377
    %1466 = vrot.lane.b32.xlu0 %v1463, 64
    %v1467 = vpop.permute.xlu0 %1466
    %v1469 = vmul.f32 %v1463, %v1467
    %1471 = vrot.lane.b32.xlu0 %v1469, 32
    %v1472 = vpop.permute.xlu0 %1471
    %v1474 = vadd.f32 %v1464, %v1472
    %v1475 = vtanh.pop %v1474
    %1477 = vrot.lane.b32.xlu0 %v1475, 64
    %v1478 = vpop.permute.xlu0 %1477
    %v1480 = vmul.f32 %v1463, %v1478
    %v1481 = vld [vmem:[%s530] sm:$0xff]
    %1483 = vrot.lane.b32.xlu0 %v1480, 32
    %v1484 = vpop.permute.xlu0 %1483
    %v1485 = vsel %vm228, %v1484, 0
    %1487 = vmatprep.subr.mxu0 0.0
    %1488 = vmatpush1.msra.mxu0 0.0
    %1489 = vmatprep.subr.mxu0 0.0
    %1490 = vmatpush1.msra.mxu0 0.0
    %1491 = vmatprep.subr.mxu0 0.0
    %1492 = vmatpush1.msra.mxu0 0.0
    %1493 = vmatprep.subr.mxu0 0.0
    %1494 = vmatpush1.msra.mxu0 0.0
    %1495 = vmatprep.subr.mxu0 0.0
    %1496 = vmatpush1.msra.mxu0 0.0
    %1497 = vmatprep.subr.mxu0 0.0
    %1498 = vmatpush1.msra.mxu0 0.0
    %1499 = vmatprep.subr.mxu0 0.0
    %1500 = vmatpush1.msra.mxu0 0.0
    %1501 = vmatprep.subr.mxu0 0.0
    %1502 = vmatpush1.msra.mxu0 0.0
    %1503 = vmatprep.subr.mxu0 0.0
    %1504 = vmatpush1.msra.mxu0 0.0
    %1505 = vmatprep.subr.mxu0 0.0
    %1506 = vmatpush1.msra.mxu0 0.0
    %1507 = vmatprep.subr.mxu0 0.0
    %1508 = vmatpush1.msra.mxu0 0.0
    %1509 = vmatprep.subr.mxu0 0.0
    %1510 = vmatpush1.msra.mxu0 0.0
    %1511 = vmatprep.subr.mxu0 0.0
    %1512 = vmatpush1.msra.mxu0 %v1042
    %1513 = vmatprep.subr.mxu0 0.0
    %1514 = vmatpush1.msra.mxu0 %v1041
    %1515 = vmatprep.subr.mxu0 0.0
    %1516 = vmatpush1.msra.mxu0 %v1040
    %1517 = vmatprep.subr.mxu0 0.0
    %1518 = vmatpush1.msra.mxu0 %v1039
    %1519 = vmatprep.subr.mxu0 0.0
    %1520 = vmatpush2.msra.mxu0 0.0
    %1521 = vmatprep.subr.mxu0 0.0
    %1522 = vmatpush2.msra.mxu0 0.0
    %1523 = vmatprep.subr.mxu0 0.0
    %1524 = vmatpush2.msra.mxu0 0.0
    %1525 = vmatprep.subr.mxu0 0.0
    %1526 = vmatpush2.msra.mxu0 0.0
    %1527 = vmatprep.subr.mxu0 0.0
    %1528 = vmatpush2.msra.mxu0 0.0
    %1529 = vmatprep.subr.mxu0 0.0
    %1530 = vmatpush2.msra.mxu0 0.0
    %1531 = vmatprep.subr.mxu0 0.0
    %1532 = vmatpush2.msra.mxu0 0.0
    %1533 = vmatprep.subr.mxu0 0.0
    %1534 = vmatpush2.msra.mxu0 0.0
    %1535 = vmatprep.subr.mxu0 0.0
    %1536 = vmatpush2.msra.mxu0 0.0
    %1537 = vmatprep.subr.mxu0 0.0
    %1538 = vmatpush2.msra.mxu0 0.0
    %1539 = vmatprep.subr.mxu0 0.0
    %1540 = vmatpush2.msra.mxu0 0.0
    %1541 = vmatprep.subr.mxu0 0.0
    %1542 = vmatpush2.msra.mxu0 0.0
    %1543 = vmatprep.subr.mxu0 0.0
    %1544 = vmatpush2.msra.mxu0 0.0
    %1545 = vmatprep.subr.mxu0 0.0
    %1546 = vmatpush2.msra.mxu0 0.0
    %1547 = vmatprep.subr.mxu0 0.0
    %1548 = vmatpush2.msra.mxu0 0.0
    %1549 = vmatprep.subr.mxu0 0.0
    %1550 = vmatpush2.msra.mxu0 0.0
    %1551 = vmatprep.mubr.f32.mxu0 0.0
    %1552 = vmatmul.mubr.f32.gmra.mxu0 %v1485
    %v1553 = vpop.f32.mrf.mxu0
    %v1554 = vadd.f32 0.0, %v1553
    %v1555 = vpop.f32.mrf.mxu0
    %1556 = vdwg.mxu0
    %v1557 = vadd.f32 %v1481, %v1554
    %v1558 = vtanh.pop %v1557
    %v1559 = vmul.f32 %v1558, %v66
    %v1560 = vadd.f32 %v1559, %v67
    %v1561 = vmul.f32 %v1560, %v1474
    %1563 = vrot.lane.b32.xlu0 %v1560, 64
    %v1564 = vpop.permute.xlu0 %1563
    %v1566 = vmul.f32 %v1560, %v1564
    %1568 = vrot.lane.b32.xlu0 %v1566, 32
    %v1569 = vpop.permute.xlu0 %1568
    %v1571 = vadd.f32 %v1561, %v1569
    %v1572 = vtanh.pop %v1571
    %1574 = vrot.lane.b32.xlu0 %v1572, 64
    %v1575 = vpop.permute.xlu0 %1574
    %v1577 = vmul.f32 %v1560, %v1575
    %v1578 = vld [vmem:[%s631] sm:$0xff]
    %1580 = vrot.lane.b32.xlu0 %v1577, 32
    %v1581 = vpop.permute.xlu0 %1580
    %v1582 = vsel %vm228, %v1581, 0
    %1584 = vmatprep.subr.mxu0 0.0
    %1585 = vmatpush1.msra.mxu0 0.0
    %1586 = vmatprep.subr.mxu0 0.0
    %1587 = vmatpush1.msra.mxu0 0.0
    %1588 = vmatprep.subr.mxu0 0.0
    %1589 = vmatpush1.msra.mxu0 0.0
    %1590 = vmatprep.subr.mxu0 0.0
    %1591 = vmatpush1.msra.mxu0 0.0
    %1592 = vmatprep.subr.mxu0 0.0
    %1593 = vmatpush1.msra.mxu0 0.0
    %1594 = vmatprep.subr.mxu0 0.0
    %1595 = vmatpush1.msra.mxu0 0.0
    %1596 = vmatprep.subr.mxu0 0.0
    %1597 = vmatpush1.msra.mxu0 0.0
    %1598 = vmatprep.subr.mxu0 0.0
    %1599 = vmatpush1.msra.mxu0 0.0
    %1600 = vmatprep.subr.mxu0 0.0
    %1601 = vmatpush1.msra.mxu0 0.0
    %1602 = vmatprep.subr.mxu0 0.0
    %1603 = vmatpush1.msra.mxu0 0.0
    %1604 = vmatprep.subr.mxu0 0.0
    %1605 = vmatpush1.msra.mxu0 0.0
    %1606 = vmatprep.subr.mxu0 0.0
    %1607 = vmatpush1.msra.mxu0 0.0
    %1608 = vmatprep.subr.mxu0 0.0
    %1609 = vmatpush1.msra.mxu0 %v1042
    %1610 = vmatprep.subr.mxu0 0.0
    %1611 = vmatpush1.msra.mxu0 %v1041
    %1612 = vmatprep.subr.mxu0 0.0
    %1613 = vmatpush1.msra.mxu0 %v1040
    %1614 = vmatprep.subr.mxu0 0.0
    %1615 = vmatpush1.msra.mxu0 %v1039
    %1616 = vmatprep.subr.mxu0 0.0
    %1617 = vmatpush2.msra.mxu0 0.0
    %1618 = vmatprep.subr.mxu0 0.0
    %1619 = vmatpush2.msra.mxu0 0.0
    %1620 = vmatprep.subr.mxu0 0.0
    %1621 = vmatpush2.msra.mxu0 0.0
    %1622 = vmatprep.subr.mxu0 0.0
    %1623 = vmatpush2.msra.mxu0 0.0
    %1624 = vmatprep.subr.mxu0 0.0
    %1625 = vmatpush2.msra.mxu0 0.0
    %1626 = vmatprep.subr.mxu0 0.0
    %1627 = vmatpush2.msra.mxu0 0.0
    %1628 = vmatprep.subr.mxu0 0.0
    %1629 = vmatpush2.msra.mxu0 0.0
    %1630 = vmatprep.subr.mxu0 0.0
    %1631 = vmatpush2.msra.mxu0 0.0
    %1632 = vmatprep.subr.mxu0 0.0
    %1633 = vmatpush2.msra.mxu0 0.0
    %1634 = vmatprep.subr.mxu0 0.0
    %1635 = vmatpush2.msra.mxu0 0.0
    %1636 = vmatprep.subr.mxu0 0.0
    %1637 = vmatpush2.msra.mxu0 0.0
    %1638 = vmatprep.subr.mxu0 0.0
    %1639 = vmatpush2.msra.mxu0 0.0
    %1640 = vmatprep.subr.mxu0 0.0
    %1641 = vmatpush2.msra.mxu0 0.0
    %1642 = vmatprep.subr.mxu0 0.0
    %1643 = vmatpush2.msra.mxu0 0.0
    %1644 = vmatprep.subr.mxu0 0.0
    %1645 = vmatpush2.msra.mxu0 0.0
    %1646 = vmatprep.subr.mxu0 0.0
    %1647 = vmatpush2.msra.mxu0 0.0
    %1648 = vmatprep.mubr.f32.mxu0 0.0
    %1649 = vmatmul.mubr.f32.gmra.mxu0 %v1582
    %v1650 = vpop.f32.mrf.mxu0
    %v1651 = vadd.f32 0.0, %v1650
    %v1652 = vpop.f32.mrf.mxu0
    %1653 = vdwg.mxu0
    %v1654 = vadd.f32 %v1578, %v1651
    %v1655 = vtanh.pop %v1654
    %v1656 = vmul.f32 %v1655, %v66
    %v1657 = vadd.f32 %v1656, %v67
    %v1658 = vmul.f32 %v1657, %v1571
    %1660 = vrot.lane.b32.xlu0 %v1657, 64
    %v1661 = vpop.permute.xlu0 %1660
    %v1663 = vmul.f32 %v1657, %v1661
    %1665 = vrot.lane.b32.xlu0 %v1663, 32
    %v1666 = vpop.permute.xlu0 %1665
    %v1668 = vadd.f32 %v1658, %v1666
    %v1669 = vtanh.pop %v1668
    %1671 = vrot.lane.b32.xlu0 %v1669, 64
    %v1672 = vpop.permute.xlu0 %1671
    %v1674 = vmul.f32 %v1657, %v1672
    %v1675 = vld [vmem:[%s732] sm:$0xff]
    %1677 = vrot.lane.b32.xlu0 %v1674, 32
    %v1678 = vpop.permute.xlu0 %1677
    %v1679 = vsel %vm228, %v1678, 0
    %1681 = vmatprep.subr.mxu0 0.0
    %1682 = vmatpush1.msra.mxu0 0.0
    %1683 = vmatprep.subr.mxu0 0.0
    %1684 = vmatpush1.msra.mxu0 0.0
    %1685 = vmatprep.subr.mxu0 0.0
    %1686 = vmatpush1.msra.mxu0 0.0
    %1687 = vmatprep.subr.mxu0 0.0
    %1688 = vmatpush1.msra.mxu0 0.0
    %1689 = vmatprep.subr.mxu0 0.0
    %1690 = vmatpush1.msra.mxu0 0.0
    %1691 = vmatprep.subr.mxu0 0.0
    %1692 = vmatpush1.msra.mxu0 0.0
    %1693 = vmatprep.subr.mxu0 0.0
    %1694 = vmatpush1.msra.mxu0 0.0
    %1695 = vmatprep.subr.mxu0 0.0
    %1696 = vmatpush1.msra.mxu0 0.0
    %1697 = vmatprep.subr.mxu0 0.0
    %1698 = vmatpush1.msra.mxu0 0.0
    %1699 = vmatprep.subr.mxu0 0.0
    %1700 = vmatpush1.msra.mxu0 0.0
    %1701 = vmatprep.subr.mxu0 0.0
    %1702 = vmatpush1.msra.mxu0 0.0
    %1703 = vmatprep.subr.mxu0 0.0
    %1704 = vmatpush1.msra.mxu0 0.0
    %1705 = vmatprep.subr.mxu0 0.0
    %1706 = vmatpush1.msra.mxu0 %v1042
    %1707 = vmatprep.subr.mxu0 0.0
    %1708 = vmatpush1.msra.mxu0 %v1041
    %1709 = vmatprep.subr.mxu0 0.0
    %1710 = vmatpush1.msra.mxu0 %v1040
    %1711 = vmatprep.subr.mxu0 0.0
    %1712 = vmatpush1.msra.mxu0 %v1039
    %1713 = vmatprep.subr.mxu0 0.0
    %1714 = vmatpush2.msra.mxu0 0.0
    %1715 = vmatprep.subr.mxu0 0.0
    %1716 = vmatpush2.msra.mxu0 0.0
    %1717 = vmatprep.subr.mxu0 0.0
    %1718 = vmatpush2.msra.mxu0 0.0
    %1719 = vmatprep.subr.mxu0 0.0
    %1720 = vmatpush2.msra.mxu0 0.0
    %1721 = vmatprep.subr.mxu0 0.0
    %1722 = vmatpush2.msra.mxu0 0.0
    %1723 = vmatprep.subr.mxu0 0.0
    %1724 = vmatpush2.msra.mxu0 0.0
    %1725 = vmatprep.subr.mxu0 0.0
    %1726 = vmatpush2.msra.mxu0 0.0
    %1727 = vmatprep.subr.mxu0 0.0
    %1728 = vmatpush2.msra.mxu0 0.0
    %1729 = vmatprep.subr.mxu0 0.0
    %1730 = vmatpush2.msra.mxu0 0.0
    %1731 = vmatprep.subr.mxu0 0.0
    %1732 = vmatpush2.msra.mxu0 0.0
    %1733 = vmatprep.subr.mxu0 0.0
    %1734 = vmatpush2.msra.mxu0 0.0
    %1735 = vmatprep.subr.mxu0 0.0
    %1736 = vmatpush2.msra.mxu0 0.0
    %1737 = vmatprep.subr.mxu0 0.0
    %1738 = vmatpush2.msra.mxu0 0.0
    %1739 = vmatprep.subr.mxu0 0.0
    %1740 = vmatpush2.msra.mxu0 0.0
    %1741 = vmatprep.subr.mxu0 0.0
    %1742 = vmatpush2.msra.mxu0 0.0
    %1743 = vmatprep.subr.mxu0 0.0
    %1744 = vmatpush2.msra.mxu0 0.0
    %1745 = vmatprep.mubr.f32.mxu0 0.0
    %1746 = vmatmul.mubr.f32.gmra.mxu0 %v1679
    %v1747 = vpop.f32.mrf.mxu0
    %v1748 = vadd.f32 0.0, %v1747
    %v1749 = vpop.f32.mrf.mxu0
    %1750 = vdwg.mxu0
    %v1751 = vadd.f32 %v1675, %v1748
    %v1752 = vtanh.pop %v1751
    %v1753 = vmul.f32 %v1752, %v66
    %v1754 = vadd.f32 %v1753, %v67
    %v1755 = vmul.f32 %v1754, %v1668
    %1757 = vrot.lane.b32.xlu0 %v1754, 64
    %v1758 = vpop.permute.xlu0 %1757
    %v1760 = vmul.f32 %v1754, %v1758
    %1762 = vrot.lane.b32.xlu0 %v1760, 32
    %v1763 = vpop.permute.xlu0 %1762
    %v1765 = vadd.f32 %v1755, %v1763
    %v1766 = vtanh.pop %v1765
    %1768 = vrot.lane.b32.xlu0 %v1766, 64
    %v1769 = vpop.permute.xlu0 %1768
    %v1771 = vmul.f32 %v1754, %v1769
    %v1772 = vld [vmem:[%s833] sm:$0xff]
    %1774 = vrot.lane.b32.xlu0 %v1771, 32
    %v1775 = vpop.permute.xlu0 %1774
    %v1776 = vsel %vm228, %v1775, 0
    %1778 = vmatprep.subr.mxu0 0.0
    %1779 = vmatpush1.msra.mxu0 0.0
    %1780 = vmatprep.subr.mxu0 0.0
    %1781 = vmatpush1.msra.mxu0 0.0
    %1782 = vmatprep.subr.mxu0 0.0
    %1783 = vmatpush1.msra.mxu0 0.0
    %1784 = vmatprep.subr.mxu0 0.0
    %1785 = vmatpush1.msra.mxu0 0.0
    %1786 = vmatprep.subr.mxu0 0.0
    %1787 = vmatpush1.msra.mxu0 0.0
    %1788 = vmatprep.subr.mxu0 0.0
    %1789 = vmatpush1.msra.mxu0 0.0
    %1790 = vmatprep.subr.mxu0 0.0
    %1791 = vmatpush1.msra.mxu0 0.0
    %1792 = vmatprep.subr.mxu0 0.0
    %1793 = vmatpush1.msra.mxu0 0.0
    %1794 = vmatprep.subr.mxu0 0.0
    %1795 = vmatpush1.msra.mxu0 0.0
    %1796 = vmatprep.subr.mxu0 0.0
    %1797 = vmatpush1.msra.mxu0 0.0
    %1798 = vmatprep.subr.mxu0 0.0
    %1799 = vmatpush1.msra.mxu0 0.0
    %1800 = vmatprep.subr.mxu0 0.0
    %1801 = vmatpush1.msra.mxu0 0.0
    %1802 = vmatprep.subr.mxu0 0.0
    %1803 = vmatpush1.msra.mxu0 %v1042
    %1804 = vmatprep.subr.mxu0 0.0
    %1805 = vmatpush1.msra.mxu0 %v1041
    %1806 = vmatprep.subr.mxu0 0.0
    %1807 = vmatpush1.msra.mxu0 %v1040
    %1808 = vmatprep.subr.mxu0 0.0
    %1809 = vmatpush1.msra.mxu0 %v1039
    %1810 = vmatprep.subr.mxu0 0.0
    %1811 = vmatpush2.msra.mxu0 0.0
    %1812 = vmatprep.subr.mxu0 0.0
    %1813 = vmatpush2.msra.mxu0 0.0
    %1814 = vmatprep.subr.mxu0 0.0
    %1815 = vmatpush2.msra.mxu0 0.0
    %1816 = vmatprep.subr.mxu0 0.0
    %1817 = vmatpush2.msra.mxu0 0.0
    %1818 = vmatprep.subr.mxu0 0.0
    %1819 = vmatpush2.msra.mxu0 0.0
    %1820 = vmatprep.subr.mxu0 0.0
    %1821 = vmatpush2.msra.mxu0 0.0
    %1822 = vmatprep.subr.mxu0 0.0
    %1823 = vmatpush2.msra.mxu0 0.0
    %1824 = vmatprep.subr.mxu0 0.0
    %1825 = vmatpush2.msra.mxu0 0.0
    %1826 = vmatprep.subr.mxu0 0.0
    %1827 = vmatpush2.msra.mxu0 0.0
    %1828 = vmatprep.subr.mxu0 0.0
    %1829 = vmatpush2.msra.mxu0 0.0
    %1830 = vmatprep.subr.mxu0 0.0
    %1831 = vmatpush2.msra.mxu0 0.0
    %1832 = vmatprep.subr.mxu0 0.0
    %1833 = vmatpush2.msra.mxu0 0.0
    %1834 = vmatprep.subr.mxu0 0.0
    %1835 = vmatpush2.msra.mxu0 0.0
    %1836 = vmatprep.subr.mxu0 0.0
    %1837 = vmatpush2.msra.mxu0 0.0
    %1838 = vmatprep.subr.mxu0 0.0
    %1839 = vmatpush2.msra.mxu0 0.0
    %1840 = vmatprep.subr.mxu0 0.0
    %1841 = vmatpush2.msra.mxu0 0.0
    %1842 = vmatprep.mubr.f32.mxu0 0.0
    %1843 = vmatmul.mubr.f32.gmra.mxu0 %v1776
    %v1844 = vpop.f32.mrf.mxu0
    %v1845 = vadd.f32 0.0, %v1844
    %v1846 = vpop.f32.mrf.mxu0
    %1847 = vdwg.mxu0
    %v1848 = vadd.f32 %v1772, %v1845
    %v1849 = vtanh.pop %v1848
    %v1850 = vmul.f32 %v1849, %v66
    %v1851 = vadd.f32 %v1850, %v67
    %v1852 = vmul.f32 %v1851, %v1765
    %1854 = vrot.lane.b32.xlu0 %v1851, 64
    %v1855 = vpop.permute.xlu0 %1854
    %v1857 = vmul.f32 %v1851, %v1855
    %1859 = vrot.lane.b32.xlu0 %v1857, 32
    %v1860 = vpop.permute.xlu0 %1859
    %v1862 = vadd.f32 %v1852, %v1860
    %v1863 = vtanh.pop %v1862
    %1865 = vrot.lane.b32.xlu0 %v1863, 64
    %v1866 = vpop.permute.xlu0 %1865
    %v1868 = vmul.f32 %v1851, %v1866
    %v1869 = vld [vmem:[%s934] sm:$0xff]
    %1871 = vrot.lane.b32.xlu0 %v1868, 32
    %v1872 = vpop.permute.xlu0 %1871
    %v1873 = vsel %vm228, %v1872, 0
    %1875 = vmatprep.subr.mxu0 0.0
    %1876 = vmatpush1.msra.mxu0 0.0
    %1877 = vmatprep.subr.mxu0 0.0
    %1878 = vmatpush1.msra.mxu0 0.0
    %1879 = vmatprep.subr.mxu0 0.0
    %1880 = vmatpush1.msra.mxu0 0.0
    %1881 = vmatprep.subr.mxu0 0.0
    %1882 = vmatpush1.msra.mxu0 0.0
    %1883 = vmatprep.subr.mxu0 0.0
    %1884 = vmatpush1.msra.mxu0 0.0
    %1885 = vmatprep.subr.mxu0 0.0
    %1886 = vmatpush1.msra.mxu0 0.0
    %1887 = vmatprep.subr.mxu0 0.0
    %1888 = vmatpush1.msra.mxu0 0.0
    %1889 = vmatprep.subr.mxu0 0.0
    %1890 = vmatpush1.msra.mxu0 0.0
    %1891 = vmatprep.subr.mxu0 0.0
    %1892 = vmatpush1.msra.mxu0 0.0
    %1893 = vmatprep.subr.mxu0 0.0
    %1894 = vmatpush1.msra.mxu0 0.0
    %1895 = vmatprep.subr.mxu0 0.0
    %1896 = vmatpush1.msra.mxu0 0.0
    %1897 = vmatprep.subr.mxu0 0.0
    %1898 = vmatpush1.msra.mxu0 0.0
    %1899 = vmatprep.subr.mxu0 0.0
    %1900 = vmatpush1.msra.mxu0 %v1042
    %1901 = vmatprep.subr.mxu0 0.0
    %1902 = vmatpush1.msra.mxu0 %v1041
    %1903 = vmatprep.subr.mxu0 0.0
    %1904 = vmatpush1.msra.mxu0 %v1040
    %1905 = vmatprep.subr.mxu0 0.0
    %1906 = vmatpush1.msra.mxu0 %v1039
    %1907 = vmatprep.subr.mxu0 0.0
    %1908 = vmatpush2.msra.mxu0 0.0
    %1909 = vmatprep.subr.mxu0 0.0
    %1910 = vmatpush2.msra.mxu0 0.0
    %1911 = vmatprep.subr.mxu0 0.0
    %1912 = vmatpush2.msra.mxu0 0.0
    %1913 = vmatprep.subr.mxu0 0.0
    %1914 = vmatpush2.msra.mxu0 0.0
    %1915 = vmatprep.subr.mxu0 0.0
    %1916 = vmatpush2.msra.mxu0 0.0
    %1917 = vmatprep.subr.mxu0 0.0
    %1918 = vmatpush2.msra.mxu0 0.0
    %1919 = vmatprep.subr.mxu0 0.0
    %1920 = vmatpush2.msra.mxu0 0.0
    %1921 = vmatprep.subr.mxu0 0.0
    %1922 = vmatpush2.msra.mxu0 0.0
    %1923 = vmatprep.subr.mxu0 0.0
    %1924 = vmatpush2.msra.mxu0 0.0
    %1925 = vmatprep.subr.mxu0 0.0
    %1926 = vmatpush2.msra.mxu0 0.0
    %1927 = vmatprep.subr.mxu0 0.0
    %1928 = vmatpush2.msra.mxu0 0.0
    %1929 = vmatprep.subr.mxu0 0.0
    %1930 = vmatpush2.msra.mxu0 0.0
    %1931 = vmatprep.subr.mxu0 0.0
    %1932 = vmatpush2.msra.mxu0 0.0
    %1933 = vmatprep.subr.mxu0 0.0
    %1934 = vmatpush2.msra.mxu0 0.0
    %1935 = vmatprep.subr.mxu0 0.0
    %1936 = vmatpush2.msra.mxu0 0.0
    %1937 = vmatprep.subr.mxu0 0.0
    %1938 = vmatpush2.msra.mxu0 0.0
    %1939 = vmatprep.mubr.f32.mxu0 0.0
    %1940 = vmatmul.mubr.f32.gmra.mxu0 %v1873
    %v1941 = vpop.f32.mrf.mxu0
    %v1942 = vadd.f32 0.0, %v1941
    %v1943 = vpop.f32.mrf.mxu0
    %1944 = vdwg.mxu0
    %v1945 = vadd.f32 %v1869, %v1942
    %v1946 = vtanh.pop %v1945
    %v1947 = vmul.f32 %v1946, %v66
    %v1948 = vadd.f32 %v1947, %v67
    %v1949 = vmul.f32 %v1948, %v1862
    %1951 = vrot.lane.b32.xlu0 %v1948, 64
    %v1952 = vpop.permute.xlu0 %1951
    %v1954 = vmul.f32 %v1948, %v1952
    %1956 = vrot.lane.b32.xlu0 %v1954, 32
    %v1957 = vpop.permute.xlu0 %1956
    %v1959 = vadd.f32 %v1949, %v1957
    %v1960 = vtanh.pop %v1959
    %1962 = vrot.lane.b32.xlu0 %v1960, 64
    %v1963 = vpop.permute.xlu0 %1962
    %v1965 = vmul.f32 %v1948, %v1963
    %v1966 = vld [vmem:[#allocation7] sm:$0xff]
    %v1967 = vld [vmem:[#allocation7 + $0x8] sm:$0xff]
    %v1968 = vld [vmem:[#allocation7 + $0x10] sm:$0xff]
    %v1969 = vld [vmem:[#allocation7 + $0x18] sm:$0xff]
    %v1970 = vld [vmem:[%s8] sm:$0x1]
    %v1972 = vlaneseq
    %v1973 = vshrl.u32 %v1972, 7
    %v1974 = vsub.s32 0, %v1973
    %v1975 = vrot.slane %v1970, %v1974
    %1978 = vrot.lane.b32.xlu0 %v1965, 32
    %v1979 = vpop.permute.xlu0 %1978
    %v1980 = vsel %vm228, %v1979, 0
    %1982 = vmatprep.subr.mxu0 0.0
    %1983 = vmatpush1.msra.mxu0 0.0
    %1984 = vmatprep.subr.mxu0 0.0
    %1985 = vmatpush1.msra.mxu0 0.0
    %1986 = vmatprep.subr.mxu0 0.0
    %1987 = vmatpush1.msra.mxu0 0.0
    %1988 = vmatprep.subr.mxu0 0.0
    %1989 = vmatpush1.msra.mxu0 0.0
    %1990 = vmatprep.subr.mxu0 0.0
    %1991 = vmatpush1.msra.mxu0 0.0
    %1992 = vmatprep.subr.mxu0 0.0
    %1993 = vmatpush1.msra.mxu0 0.0
    %1994 = vmatprep.subr.mxu0 0.0
    %1995 = vmatpush1.msra.mxu0 0.0
    %1996 = vmatprep.subr.mxu0 0.0
    %1997 = vmatpush1.msra.mxu0 0.0
    %1998 = vmatprep.subr.mxu0 0.0
    %1999 = vmatpush1.msra.mxu0 0.0
    %2000 = vmatprep.subr.mxu0 0.0
    %2001 = vmatpush1.msra.mxu0 0.0
    %2002 = vmatprep.subr.mxu0 0.0
    %2003 = vmatpush1.msra.mxu0 0.0
    %2004 = vmatprep.subr.mxu0 0.0
    %2005 = vmatpush1.msra.mxu0 0.0
    %2006 = vmatprep.subr.mxu0 0.0
    %2007 = vmatpush1.msra.mxu0 %v1969
    %2008 = vmatprep.subr.mxu0 0.0
    %2009 = vmatpush1.msra.mxu0 %v1968
    %2010 = vmatprep.subr.mxu0 0.0
    %2011 = vmatpush1.msra.mxu0 %v1967
    %2012 = vmatprep.subr.mxu0 0.0
    %2013 = vmatpush1.msra.mxu0 %v1966
    %2014 = vmatprep.subr.mxu0 0.0
    %2015 = vmatpush2.msra.mxu0 0.0
    %2016 = vmatprep.subr.mxu0 0.0
    %2017 = vmatpush2.msra.mxu0 0.0
    %2018 = vmatprep.subr.mxu0 0.0
    %2019 = vmatpush2.msra.mxu0 0.0
    %2020 = vmatprep.subr.mxu0 0.0
    %2021 = vmatpush2.msra.mxu0 0.0
    %2022 = vmatprep.subr.mxu0 0.0
    %2023 = vmatpush2.msra.mxu0 0.0
    %2024 = vmatprep.subr.mxu0 0.0
    %2025 = vmatpush2.msra.mxu0 0.0
    %2026 = vmatprep.subr.mxu0 0.0
    %2027 = vmatpush2.msra.mxu0 0.0
    %2028 = vmatprep.subr.mxu0 0.0
    %2029 = vmatpush2.msra.mxu0 0.0
    %2030 = vmatprep.subr.mxu0 0.0
    %2031 = vmatpush2.msra.mxu0 0.0
    %2032 = vmatprep.subr.mxu0 0.0
    %2033 = vmatpush2.msra.mxu0 0.0
    %2034 = vmatprep.subr.mxu0 0.0
    %2035 = vmatpush2.msra.mxu0 0.0
    %2036 = vmatprep.subr.mxu0 0.0
    %2037 = vmatpush2.msra.mxu0 0.0
    %2038 = vmatprep.subr.mxu0 0.0
    %2039 = vmatpush2.msra.mxu0 0.0
    %2040 = vmatprep.subr.mxu0 0.0
    %2041 = vmatpush2.msra.mxu0 0.0
    %2042 = vmatprep.subr.mxu0 0.0
    %2043 = vmatpush2.msra.mxu0 0.0
    %2044 = vmatprep.subr.mxu0 0.0
    %2045 = vmatpush2.msra.mxu0 0.0
    %2046 = vmatprep.mubr.f32.mxu0 0.0
    %2047 = vmatmul.mubr.f32.gmra.mxu0 %v1980
    %v2048 = vpop.f32.mrf.mxu0
    %v2049 = vadd.f32 %v1975, %v2048
    %v2050 = vpop.f32.mrf.mxu0
    %2051 = vdwg.mxu0
    %2052 = vst [vmem:[#allocation9] sm:$0xff] %v2049
    // Predicated region
    $region46: #{tpu_custom_call.1} parent=1 // pred_check
      _
    $region47: #{tpu_custom_call.1} parent=1 // pred_check_branch
      %2054 = sbr.rel (0) target = $region49
    $region48: #{tpu_custom_call.1} parent=1 // pred_region
      %s2056 = ssub.s32 128, 128
      %2057 = vsyncadd [#allocation6], %s2056
      %s2059 = sshll.u32 [#allocation9], 4
      %s2060 = int_to_ptr.vmem [resolvable:$true] %s2059
      %2062 = dma.vmem_to_hbm [thread:$0]  %s2060, 128, %s9, [#allocation6]
    $region49: #{tpu_custom_call.1} parent=1 // pred_fallthru
      _
    // Predicated region
    $region50: #{tpu_custom_call.1} parent=1 // pred_check
      _
    $region51: #{tpu_custom_call.1} parent=1 // pred_check_branch
      %2064 = sbr.rel (0) target = $region53
    $region52: #{tpu_custom_call.1} parent=1 // pred_region
      %2065 = dma.done [#allocation6], 128
    $region53: #{tpu_custom_call.1} parent=1 // pred_fallthru
      _
    %2066 = vsyncpa [#allocation5], 1
    %2067 = vsyncpa [#allocation8], 1
    %2068 = vsyncpa [#allocation6], 1

</llo_original>
